<compile_context>
chip_gen: v5e
topology: v5e:2x2
jax: 0.10.0
libtpu: 0.0.40
codegen_flags: <defaults>
</compile_context>

<pallas_src>
import functools

import jax
import jax.numpy as jnp
from jax.experimental import pallas as pl
from jax.experimental.pallas import tpu as pltpu
import numpy as np

_LANES = 128


def _round_up(x, m):
    return (x + m - 1) // m * m


def _pad(x, shape):
    """Zero-pad `x` up to `shape` (no-op when already that shape)."""
    if tuple(x.shape) == tuple(shape):
        return x
    return jnp.zeros(shape, x.dtype).at[tuple(slice(0, s) for s in x.shape)].set(x)


def _bit_tree_select(cat_i, rows):
    """Binary select tree: rows[cat_i] elementwise, len(rows) a power of two.

    cat_i : (Np, 128) int32 category ids.
    rows  : list of (Np, 128) f32 per-category weight slabs (padded with zeros).
    Ids in the zero-padded range select 0, matching the previous linear chain; ids
    outside [0, len(rows)) are undefined (well-formed CLEVR data never hits this).
    """
    level = list(rows)
    bit = 0
    while len(level) > 1:
        b = (cat_i & (1 << bit)) != 0
        level = [jnp.where(b, level[2 * k + 1], level[2 * k])
                 for k in range(len(level) // 2)]
        bit += 1
    return level[0]


def _relate_kernel(attn_ref, cat_ref, query_ref, edge_ref, out_ref):
    """One batch tile of TB independent Relate problems (batch on the lane axis).

    attn_ref  : (Np, TB)     f32    attn[i, b]
    cat_ref   : (Np, Np, TB) i8/i32 cat[i, j, b]  (edge-category id per node pair)
    query_ref : (D,  TB)     f32    query[d, b]
    edge_ref  : (C,  D)      f32    shared edge-category embeddings
    out_ref   : (Np, TB)     f32    out[j, b]
    """
    Np, TB = attn_ref.shape
    C, _ = edge_ref.shape
    n_strips = TB // _LANES

    edge = edge_ref[...]                                   # (C, D), loop-invariant

    P = 1
    while P < C:                                           # pad category count to pow2
        P *= 2

    @pl.loop(0, n_strips)                                  # strip-mine over 128-lane slabs
    def _(s):
        off = pl.multiple_of(s * _LANES, _LANES)

        # --- AttendEdge: logits[c,b] = <edge[c], query[:,b]>, softmax over c ---
        q = query_ref[:, pl.ds(off, _LANES)]                               # (D, 128)
        logits = jnp.dot(edge, q, preferred_element_type=jnp.float32)      # (C, 128) MXU
        m = jnp.max(logits, axis=0, keepdims=True)                         # (1, 128)
        e = jnp.exp(logits - m)                                            # EUP
        denom = jnp.sum(e, axis=0, keepdims=True)                          # (1, 128)
        inv = pl.reciprocal(denom, approx=True)                            # EUP slot
        inv = inv * (2.0 - denom * inv)                                    # 1 Newton step
        p = e * inv                                                        # (C, 128)

        # Hoist the lane-dense broadcasts of the C category weights out of the node
        # loop (re-done per strip; JAX does not CSE broadcast_in_dim).
        zeros = jnp.zeros((Np, _LANES), jnp.float32)
        rows = [jnp.broadcast_to(p[c][None, :], (Np, _LANES)) for c in range(C)]
        rows += [zeros] * (P - C)                          # padded ids -> weight 0

        attn = attn_ref[:, pl.ds(off, _LANES)]                             # (Np, 128)

        # --- fused gather + transfer ---
        #   weit[i, j, b] = p[cat[i, j, b], b]   (bit-tree select over categories)
        #   out[j, b]     = sum_i attn[i, b] * weit[i, j, b]
        out = zeros
        for i in range(Np):                                # static unroll: source nodes
            cat_i = cat_ref[i, :, pl.ds(off, _LANES)].astype(jnp.int32)    # (Np, 128)
            w_i = _bit_tree_select(cat_i, rows)                            # (Np, 128)
            out = out + attn[i][None, :] * w_i
        out_ref[:, pl.ds(off, _LANES)] = out


@functools.partial(jax.jit, static_argnames=("block_b",))
def relate_module_batched(attn, cat_matrix, edge_cat_vectors, query, feat=None,
                          *, block_b=512):
    """Batched RelateModule.forward.

    attn             : (B, N)    f32
    cat_matrix       : (B, N, N) int   edge-category ids, expected in [0, C)
    edge_cat_vectors : (C, D)    f32   shared across the batch
    query            : (B, D)    f32
    feat             : unused (kept for signature parity with PyTorch)
    returns          : (B, N)    f32
    """
    del feat
    B, N = attn.shape
    C, D = edge_cat_vectors.shape
    assert cat_matrix.shape == (B, N, N)
    assert query.shape == (B, D)
    assert block_b % _LANES == 0, "batch tile must be lane-dense (multiple of 128)"
    # NOTE: cat ids outside [0, C) silently map to weight 0 here, whereas PyTorch's
    # p[cat_matrix] indexing would error; well-formed CLEVR data never hits this.

    Np = _round_up(N, 8)                       # sublane-aligned node count
    Bp0 = _round_up(B, _LANES)
    # Keep >= ~4 grid steps when B allows so v7x's two TensorCores each get >= 2
    # pipelined steps; cap at block_b (strips inside the kernel amortize overhead).
    TB = min(block_b, max(_LANES, _round_up(Bp0 // 4, _LANES)))
    TB = (TB // _LANES) * _LANES
    Bp = _round_up(B, TB)

    cat_dtype = jnp.int8 if C <= 127 else jnp.int32

    # Layout plumbing (one-time XLA transposes): batch on the 128-lane axis.  The
    # int8 cast happens *before* the transpose so the materialized copy of cat is
    # 4x smaller; padding is skipped entirely when shapes already align.  Producers
    # that can emit cat directly as (N, N, B) int8 avoid this relayout altogether.
    attn_t = _pad(jnp.transpose(attn.astype(jnp.float32)), (Np, Bp))            # (Np, Bp)
    cat_t = _pad(jnp.transpose(cat_matrix.astype(cat_dtype), (1, 2, 0)),
                 (Np, Np, Bp))                                                   # (Np, Np, Bp)
    query_t = _pad(jnp.transpose(query.astype(jnp.float32)), (D, Bp))            # (D, Bp)
    edge = edge_cat_vectors.astype(jnp.float32)                                  # (C, D)

    out_t = pl.pallas_call(
        _relate_kernel,
        out_shape=jax.ShapeDtypeStruct((Np, Bp), jnp.float32),
        grid_spec=pltpu.PrefetchScalarGridSpec(
            num_scalar_prefetch=0,
            grid=(Bp // TB,),
            in_specs=[
                pl.BlockSpec((Np, TB), lambda b: (0, b)),          # attn_t
                pl.BlockSpec((Np, Np, TB), lambda b: (0, 0, b)),   # cat_t (int8)
                pl.BlockSpec((D, TB), lambda b: (0, b)),           # query_t
                pl.BlockSpec((C, D), lambda b: (0, 0)),            # edge (shared)
            ],
            out_specs=pl.BlockSpec((Np, TB), lambda b: (0, b)),
        ),
        compiler_params=pltpu.CompilerParams(
            # independent batch tiles -> v7x's two TensorCores split the grid
            dimension_semantics=("parallel",)),
    )(attn_t, cat_t, query_t, edge)

    return jnp.transpose(out_t[:N, :B])                                          # (B, N)


def relate_module(attn, cat_matrix, edge_cat_vectors, query, feat=None):
    """Single-instance wrapper mirroring RelateModule.forward (PyTorch signature)."""
    out = relate_module_batched(attn[None], cat_matrix[None], edge_cat_vectors,
                                query[None], feat)
    return out[0]


def relate_reference(attn, cat_matrix, edge_cat_vectors, query):
    """Pure-JAX reference for one instance."""
    logits = edge_cat_vectors @ query                  # (C,)
    p = jax.nn.softmax(logits, axis=0)                 # (C,)
    weit = p[cat_matrix]                               # (N, N)
    return attn @ weit                                 # (N,)


def _make_inputs(key, batch, num_node, num_edge_cat, dim_v):
    k1, k2, k3, k4, k5 = jax.random.split(key, 5)
    attn = jax.nn.softmax(jax.random.normal(k1, (batch, num_node), jnp.float32), axis=-1)
    cat_matrix = jax.random.randint(k2, (batch, num_node, num_node), 0, num_edge_cat,
                                    dtype=jnp.int32)
    edge_cat_vectors = jax.random.normal(k3, (num_edge_cat, dim_v), jnp.float32)
    query = jax.random.normal(k4, (batch, dim_v), jnp.float32)
    feat = jax.random.normal(k5, (batch, num_node, dim_v), jnp.float32)  # unused
    return attn, cat_matrix, edge_cat_vectors, query, feat


if __name__ == "__main__":
    num_node, num_edge_cat, dim_v = 16, 8, 32
    key = jax.random.PRNGKey(0)
    k_a, k_b = jax.random.split(key)

    # ---- case 1: modest batch (TB=128, 2 grid steps, 1 strip per step) ----
    attn, cat, edge, query, feat = _make_inputs(k_a, 256, num_node, num_edge_cat, dim_v)
    out = jax.block_until_ready(relate_module_batched(attn, cat, edge, query, feat))
    ref = jax.vmap(relate_reference, in_axes=(0, 0, None, 0))(attn, cat, edge, query)
    np.testing.assert_allclose(np.asarray(out), np.asarray(ref), rtol=1e-3, atol=1e-5)

    # ---- case 2: larger batch exercising the strip-mined path (TB=256, 2 strips) ----
    attn2, cat2, edge2, query2, feat2 = _make_inputs(k_b, 1024, num_node, num_edge_cat, dim_v)
    out2 = jax.block_until_ready(relate_module_batched(attn2, cat2, edge2, query2, feat2))
    ref2 = jax.vmap(relate_reference, in_axes=(0, 0, None, 0))(attn2, cat2, edge2, query2)
    np.testing.assert_allclose(np.asarray(out2), np.asarray(ref2), rtol=1e-3, atol=1e-5)

    # ---- single-instance path (1:1 with the PyTorch forward signature) ----
    out1 = jax.block_until_ready(
        relate_module(attn[0], cat[0], edge, query[0], feat[0]))
    np.testing.assert_allclose(np.asarray(out1), np.asarray(ref[0]), rtol=1e-3, atol=1e-5)

    print("KERNEL_OK")
</pallas_src>

<mosaic_0001>
module attributes {stable_mosaic.version = 11 : i64} {
  func.func @_relate_kernel(%arg0: i32, %arg1: memref<16x128xf32, #tpu.memory_space<vmem>>, %arg2: memref<16x16x128xi8, #tpu.memory_space<vmem>>, %arg3: memref<32x128xf32, #tpu.memory_space<vmem>>, %arg4: memref<8x32xf32, #tpu.memory_space<vmem>>, %arg5: memref<16x128xf32, #tpu.memory_space<vmem>>) attributes {dimension_semantics = [#tpu.dimension_semantics<parallel>], iteration_bounds = array<i64: 2>, scalar_prefetch = 0 : i64, scratch_operands = 0 : i64, tpu.core_type = #tpu.core_type<tc>, window_params = [{transform_indices = @transform_0, window_bounds = array<i64: 16, 128>}, {transform_indices = @transform_1, window_bounds = array<i64: 16, 16, 128>}, {transform_indices = @transform_2, window_bounds = array<i64: 32, 128>}, {pipeline_mode = #tpu.pipeline_mode<synchronous>, transform_indices = @transform_3, window_bounds = array<i64: 8, 32>}, {transform_indices = @transform_4, window_bounds = array<i64: 16, 128>}]} {
    %c0 = arith.constant 0 : index
    %c0_0 = arith.constant 0 : index
    %0 = vector.load %arg4[%c0, %c0_0] : memref<8x32xf32, #tpu.memory_space<vmem>>, vector<8x32xf32>
    %c0_i32 = arith.constant 0 : i32
    %c1_i32 = arith.constant 1 : i32
    %1 = arith.muli %c0_i32, %c1_i32 : i32
    %c0_i32_1 = arith.constant 0 : i32
    %2 = arith.addi %c0_i32_1, %1 : i32
    %c128_i32 = arith.constant 128 : i32
    %3 = arith.muli %2, %c128_i32 : i32
    %4 = tpu.assume_multiple %3, 128 : i32
    %c0_2 = arith.constant 0 : index
    %5 = arith.index_cast %4 : i32 to index
    %6 = vector.load %arg3[%c0_2, %5] : memref<32x128xf32, #tpu.memory_space<vmem>>, vector<32x128xf32>
    %cst = arith.constant dense<0.000000e+00> : vector<8x128xf32>
    %7 = tpu.matmul %0, %6, %cst {dimension_numbers = #tpu.dot_dimension_numbers<[1], [0], [0], [1], [0, 0, 1, 1], [], []>} : vector<8x32xf32>, vector<32x128xf32>, vector<8x128xf32> -> vector<8x128xf32>
    %cst_3 = arith.constant dense<0xFF800000> : vector<128xf32>
    %8 = vector.multi_reduction <maximumf>, %7, %cst_3 [0] : vector<8x128xf32> to vector<128xf32>
    %9 = vector.shape_cast %8 : vector<128xf32> to vector<1x128xf32>
    %10 = vector.broadcast %9 : vector<1x128xf32> to vector<8x128xf32>
    %11 = arith.subf %7, %10 : vector<8x128xf32>
    %12 = math.exp %11 : vector<8x128xf32>
    %cst_4 = arith.constant dense<0.000000e+00> : vector<128xf32>
    %13 = vector.multi_reduction <add>, %12, %cst_4 [0] : vector<8x128xf32> to vector<128xf32>
    %14 = vector.shape_cast %13 : vector<128xf32> to vector<1x128xf32>
    %15 = tpu.reciprocal %14 {approx = true} : vector<1x128xf32> -> vector<1x128xf32>
    %16 = arith.mulf %14, %15 : vector<1x128xf32>
    %cst_5 = arith.constant 2.000000e+00 : f32
    %17 = vector.broadcast %cst_5 : f32 to vector<1x128xf32>
    %18 = arith.subf %17, %16 : vector<1x128xf32>
    %19 = arith.mulf %15, %18 : vector<1x128xf32>
    %20 = vector.broadcast %19 : vector<1x128xf32> to vector<8x128xf32>
    %21 = arith.mulf %12, %20 : vector<8x128xf32>
    %cst_6 = arith.constant 0.000000e+00 : f32
    %22 = vector.broadcast %cst_6 : f32 to vector<16x128xf32>
    %23 = vector.extract_strided_slice %21 {offsets = [0, 0], sizes = [1, 128], strides = [1, 1]} : vector<8x128xf32> to vector<1x128xf32>
    %24 = vector.shape_cast %23 : vector<1x128xf32> to vector<128xf32>
    %25 = vector.shape_cast %24 : vector<128xf32> to vector<1x128xf32>
    %26 = vector.shape_cast %25 : vector<1x128xf32> to vector<1x128xf32>
    %27 = vector.broadcast %26 : vector<1x128xf32> to vector<16x128xf32>
    %28 = vector.extract_strided_slice %21 {offsets = [1, 0], sizes = [1, 128], strides = [1, 1]} : vector<8x128xf32> to vector<1x128xf32>
    %29 = vector.shape_cast %28 : vector<1x128xf32> to vector<128xf32>
    %30 = vector.shape_cast %29 : vector<128xf32> to vector<1x128xf32>
    %31 = vector.shape_cast %30 : vector<1x128xf32> to vector<1x128xf32>
    %32 = vector.broadcast %31 : vector<1x128xf32> to vector<16x128xf32>
    %33 = vector.extract_strided_slice %21 {offsets = [2, 0], sizes = [1, 128], strides = [1, 1]} : vector<8x128xf32> to vector<1x128xf32>
    %34 = vector.shape_cast %33 : vector<1x128xf32> to vector<128xf32>
    %35 = vector.shape_cast %34 : vector<128xf32> to vector<1x128xf32>
    %36 = vector.shape_cast %35 : vector<1x128xf32> to vector<1x128xf32>
    %37 = vector.broadcast %36 : vector<1x128xf32> to vector<16x128xf32>
    %38 = vector.extract_strided_slice %21 {offsets = [3, 0], sizes = [1, 128], strides = [1, 1]} : vector<8x128xf32> to vector<1x128xf32>
    %39 = vector.shape_cast %38 : vector<1x128xf32> to vector<128xf32>
    %40 = vector.shape_cast %39 : vector<128xf32> to vector<1x128xf32>
    %41 = vector.shape_cast %40 : vector<1x128xf32> to vector<1x128xf32>
    %42 = vector.broadcast %41 : vector<1x128xf32> to vector<16x128xf32>
    %43 = vector.extract_strided_slice %21 {offsets = [4, 0], sizes = [1, 128], strides = [1, 1]} : vector<8x128xf32> to vector<1x128xf32>
    %44 = vector.shape_cast %43 : vector<1x128xf32> to vector<128xf32>
    %45 = vector.shape_cast %44 : vector<128xf32> to vector<1x128xf32>
    %46 = vector.shape_cast %45 : vector<1x128xf32> to vector<1x128xf32>
    %47 = vector.broadcast %46 : vector<1x128xf32> to vector<16x128xf32>
    %48 = vector.extract_strided_slice %21 {offsets = [5, 0], sizes = [1, 128], strides = [1, 1]} : vector<8x128xf32> to vector<1x128xf32>
    %49 = vector.shape_cast %48 : vector<1x128xf32> to vector<128xf32>
    %50 = vector.shape_cast %49 : vector<128xf32> to vector<1x128xf32>
    %51 = vector.shape_cast %50 : vector<1x128xf32> to vector<1x128xf32>
    %52 = vector.broadcast %51 : vector<1x128xf32> to vector<16x128xf32>
    %53 = vector.extract_strided_slice %21 {offsets = [6, 0], sizes = [1, 128], strides = [1, 1]} : vector<8x128xf32> to vector<1x128xf32>
    %54 = vector.shape_cast %53 : vector<1x128xf32> to vector<128xf32>
    %55 = vector.shape_cast %54 : vector<128xf32> to vector<1x128xf32>
    %56 = vector.shape_cast %55 : vector<1x128xf32> to vector<1x128xf32>
    %57 = vector.broadcast %56 : vector<1x128xf32> to vector<16x128xf32>
    %58 = vector.extract_strided_slice %21 {offsets = [7, 0], sizes = [1, 128], strides = [1, 1]} : vector<8x128xf32> to vector<1x128xf32>
    %59 = vector.shape_cast %58 : vector<1x128xf32> to vector<128xf32>
    %60 = vector.shape_cast %59 : vector<128xf32> to vector<1x128xf32>
    %61 = vector.shape_cast %60 : vector<1x128xf32> to vector<1x128xf32>
    %62 = vector.broadcast %61 : vector<1x128xf32> to vector<16x128xf32>
    %c0_7 = arith.constant 0 : index
    %63 = arith.index_cast %4 : i32 to index
    %64 = vector.load %arg1[%c0_7, %63] : memref<16x128xf32, #tpu.memory_space<vmem>>, vector<16x128xf32>
    %c0_8 = arith.constant 0 : index
    %c0_9 = arith.constant 0 : index
    %65 = arith.index_cast %4 : i32 to index
    %66 = vector.load %arg2[%c0_8, %c0_9, %65] : memref<16x16x128xi8, #tpu.memory_space<vmem>>, vector<1x16x128xi8>
    %67 = vector.shape_cast %66 : vector<1x16x128xi8> to vector<16x128xi8>
    %68 = arith.extsi %67 : vector<16x128xi8> to vector<16x128xi32>
    %c1_i32_10 = arith.constant 1 : i32
    %69 = vector.broadcast %c1_i32_10 : i32 to vector<16x128xi32>
    %70 = arith.andi %68, %69 : vector<16x128xi32>
    %c0_i32_11 = arith.constant 0 : i32
    %71 = vector.broadcast %c0_i32_11 : i32 to vector<16x128xi32>
    %72 = arith.cmpi ne, %70, %71 : vector<16x128xi32>
    %73 = arith.select %72, %32, %27 : vector<16x128xi1>, vector<16x128xf32>
    %74 = arith.select %72, %42, %37 : vector<16x128xi1>, vector<16x128xf32>
    %75 = arith.select %72, %52, %47 : vector<16x128xi1>, vector<16x128xf32>
    %76 = arith.select %72, %62, %57 : vector<16x128xi1>, vector<16x128xf32>
    %c2_i32 = arith.constant 2 : i32
    %77 = vector.broadcast %c2_i32 : i32 to vector<16x128xi32>
    %78 = arith.andi %68, %77 : vector<16x128xi32>
    %c0_i32_12 = arith.constant 0 : i32
    %79 = vector.broadcast %c0_i32_12 : i32 to vector<16x128xi32>
    %80 = arith.cmpi ne, %78, %79 : vector<16x128xi32>
    %81 = arith.select %80, %74, %73 : vector<16x128xi1>, vector<16x128xf32>
    %82 = arith.select %80, %76, %75 : vector<16x128xi1>, vector<16x128xf32>
    %c4_i32 = arith.constant 4 : i32
    %83 = vector.broadcast %c4_i32 : i32 to vector<16x128xi32>
    %84 = arith.andi %68, %83 : vector<16x128xi32>
    %c0_i32_13 = arith.constant 0 : i32
    %85 = vector.broadcast %c0_i32_13 : i32 to vector<16x128xi32>
    %86 = arith.cmpi ne, %84, %85 : vector<16x128xi32>
    %87 = arith.select %86, %82, %81 : vector<16x128xi1>, vector<16x128xf32>
    %88 = vector.extract_strided_slice %64 {offsets = [0, 0], sizes = [1, 128], strides = [1, 1]} : vector<16x128xf32> to vector<1x128xf32>
    %89 = vector.shape_cast %88 : vector<1x128xf32> to vector<128xf32>
    %90 = vector.shape_cast %89 : vector<128xf32> to vector<1x128xf32>
    %91 = vector.broadcast %90 : vector<1x128xf32> to vector<16x128xf32>
    %92 = arith.mulf %91, %87 : vector<16x128xf32>
    %93 = arith.addf %22, %92 : vector<16x128xf32>
    %c1 = arith.constant 1 : index
    %c0_14 = arith.constant 0 : index
    %94 = arith.index_cast %4 : i32 to index
    %95 = vector.load %arg2[%c1, %c0_14, %94] : memref<16x16x128xi8, #tpu.memory_space<vmem>>, vector<1x16x128xi8>
    %96 = vector.shape_cast %95 : vector<1x16x128xi8> to vector<16x128xi8>
    %97 = arith.extsi %96 : vector<16x128xi8> to vector<16x128xi32>
    %c1_i32_15 = arith.constant 1 : i32
    %98 = vector.broadcast %c1_i32_15 : i32 to vector<16x128xi32>
    %99 = arith.andi %97, %98 : vector<16x128xi32>
    %c0_i32_16 = arith.constant 0 : i32
    %100 = vector.broadcast %c0_i32_16 : i32 to vector<16x128xi32>
    %101 = arith.cmpi ne, %99, %100 : vector<16x128xi32>
    %102 = arith.select %101, %32, %27 : vector<16x128xi1>, vector<16x128xf32>
    %103 = arith.select %101, %42, %37 : vector<16x128xi1>, vector<16x128xf32>
    %104 = arith.select %101, %52, %47 : vector<16x128xi1>, vector<16x128xf32>
    %105 = arith.select %101, %62, %57 : vector<16x128xi1>, vector<16x128xf32>
    %c2_i32_17 = arith.constant 2 : i32
    %106 = vector.broadcast %c2_i32_17 : i32 to vector<16x128xi32>
    %107 = arith.andi %97, %106 : vector<16x128xi32>
    %c0_i32_18 = arith.constant 0 : i32
    %108 = vector.broadcast %c0_i32_18 : i32 to vector<16x128xi32>
    %109 = arith.cmpi ne, %107, %108 : vector<16x128xi32>
    %110 = arith.select %109, %103, %102 : vector<16x128xi1>, vector<16x128xf32>
    %111 = arith.select %109, %105, %104 : vector<16x128xi1>, vector<16x128xf32>
    %c4_i32_19 = arith.constant 4 : i32
    %112 = vector.broadcast %c4_i32_19 : i32 to vector<16x128xi32>
    %113 = arith.andi %97, %112 : vector<16x128xi32>
    %c0_i32_20 = arith.constant 0 : i32
    %114 = vector.broadcast %c0_i32_20 : i32 to vector<16x128xi32>
    %115 = arith.cmpi ne, %113, %114 : vector<16x128xi32>
    %116 = arith.select %115, %111, %110 : vector<16x128xi1>, vector<16x128xf32>
    %117 = vector.extract_strided_slice %64 {offsets = [1, 0], sizes = [1, 128], strides = [1, 1]} : vector<16x128xf32> to vector<1x128xf32>
    %118 = vector.shape_cast %117 : vector<1x128xf32> to vector<128xf32>
    %119 = vector.shape_cast %118 : vector<128xf32> to vector<1x128xf32>
    %120 = vector.broadcast %119 : vector<1x128xf32> to vector<16x128xf32>
    %121 = arith.mulf %120, %116 : vector<16x128xf32>
    %122 = arith.addf %93, %121 : vector<16x128xf32>
    %c2 = arith.constant 2 : index
    %c0_21 = arith.constant 0 : index
    %123 = arith.index_cast %4 : i32 to index
    %124 = vector.load %arg2[%c2, %c0_21, %123] : memref<16x16x128xi8, #tpu.memory_space<vmem>>, vector<1x16x128xi8>
    %125 = vector.shape_cast %124 : vector<1x16x128xi8> to vector<16x128xi8>
    %126 = arith.extsi %125 : vector<16x128xi8> to vector<16x128xi32>
    %c1_i32_22 = arith.constant 1 : i32
    %127 = vector.broadcast %c1_i32_22 : i32 to vector<16x128xi32>
    %128 = arith.andi %126, %127 : vector<16x128xi32>
    %c0_i32_23 = arith.constant 0 : i32
    %129 = vector.broadcast %c0_i32_23 : i32 to vector<16x128xi32>
    %130 = arith.cmpi ne, %128, %129 : vector<16x128xi32>
    %131 = arith.select %130, %32, %27 : vector<16x128xi1>, vector<16x128xf32>
    %132 = arith.select %130, %42, %37 : vector<16x128xi1>, vector<16x128xf32>
    %133 = arith.select %130, %52, %47 : vector<16x128xi1>, vector<16x128xf32>
    %134 = arith.select %130, %62, %57 : vector<16x128xi1>, vector<16x128xf32>
    %c2_i32_24 = arith.constant 2 : i32
    %135 = vector.broadcast %c2_i32_24 : i32 to vector<16x128xi32>
    %136 = arith.andi %126, %135 : vector<16x128xi32>
    %c0_i32_25 = arith.constant 0 : i32
    %137 = vector.broadcast %c0_i32_25 : i32 to vector<16x128xi32>
    %138 = arith.cmpi ne, %136, %137 : vector<16x128xi32>
    %139 = arith.select %138, %132, %131 : vector<16x128xi1>, vector<16x128xf32>
    %140 = arith.select %138, %134, %133 : vector<16x128xi1>, vector<16x128xf32>
    %c4_i32_26 = arith.constant 4 : i32
    %141 = vector.broadcast %c4_i32_26 : i32 to vector<16x128xi32>
    %142 = arith.andi %126, %141 : vector<16x128xi32>
    %c0_i32_27 = arith.constant 0 : i32
    %143 = vector.broadcast %c0_i32_27 : i32 to vector<16x128xi32>
    %144 = arith.cmpi ne, %142, %143 : vector<16x128xi32>
    %145 = arith.select %144, %140, %139 : vector<16x128xi1>, vector<16x128xf32>
    %146 = vector.extract_strided_slice %64 {offsets = [2, 0], sizes = [1, 128], strides = [1, 1]} : vector<16x128xf32> to vector<1x128xf32>
    %147 = vector.shape_cast %146 : vector<1x128xf32> to vector<128xf32>
    %148 = vector.shape_cast %147 : vector<128xf32> to vector<1x128xf32>
    %149 = vector.broadcast %148 : vector<1x128xf32> to vector<16x128xf32>
    %150 = arith.mulf %149, %145 : vector<16x128xf32>
    %151 = arith.addf %122, %150 : vector<16x128xf32>
    %c3 = arith.constant 3 : index
    %c0_28 = arith.constant 0 : index
    %152 = arith.index_cast %4 : i32 to index
    %153 = vector.load %arg2[%c3, %c0_28, %152] : memref<16x16x128xi8, #tpu.memory_space<vmem>>, vector<1x16x128xi8>
    %154 = vector.shape_cast %153 : vector<1x16x128xi8> to vector<16x128xi8>
    %155 = arith.extsi %154 : vector<16x128xi8> to vector<16x128xi32>
    %c1_i32_29 = arith.constant 1 : i32
    %156 = vector.broadcast %c1_i32_29 : i32 to vector<16x128xi32>
    %157 = arith.andi %155, %156 : vector<16x128xi32>
    %c0_i32_30 = arith.constant 0 : i32
    %158 = vector.broadcast %c0_i32_30 : i32 to vector<16x128xi32>
    %159 = arith.cmpi ne, %157, %158 : vector<16x128xi32>
    %160 = arith.select %159, %32, %27 : vector<16x128xi1>, vector<16x128xf32>
    %161 = arith.select %159, %42, %37 : vector<16x128xi1>, vector<16x128xf32>
    %162 = arith.select %159, %52, %47 : vector<16x128xi1>, vector<16x128xf32>
    %163 = arith.select %159, %62, %57 : vector<16x128xi1>, vector<16x128xf32>
    %c2_i32_31 = arith.constant 2 : i32
    %164 = vector.broadcast %c2_i32_31 : i32 to vector<16x128xi32>
    %165 = arith.andi %155, %164 : vector<16x128xi32>
    %c0_i32_32 = arith.constant 0 : i32
    %166 = vector.broadcast %c0_i32_32 : i32 to vector<16x128xi32>
    %167 = arith.cmpi ne, %165, %166 : vector<16x128xi32>
    %168 = arith.select %167, %161, %160 : vector<16x128xi1>, vector<16x128xf32>
    %169 = arith.select %167, %163, %162 : vector<16x128xi1>, vector<16x128xf32>
    %c4_i32_33 = arith.constant 4 : i32
    %170 = vector.broadcast %c4_i32_33 : i32 to vector<16x128xi32>
    %171 = arith.andi %155, %170 : vector<16x128xi32>
    %c0_i32_34 = arith.constant 0 : i32
    %172 = vector.broadcast %c0_i32_34 : i32 to vector<16x128xi32>
    %173 = arith.cmpi ne, %171, %172 : vector<16x128xi32>
    %174 = arith.select %173, %169, %168 : vector<16x128xi1>, vector<16x128xf32>
    %175 = vector.extract_strided_slice %64 {offsets = [3, 0], sizes = [1, 128], strides = [1, 1]} : vector<16x128xf32> to vector<1x128xf32>
    %176 = vector.shape_cast %175 : vector<1x128xf32> to vector<128xf32>
    %177 = vector.shape_cast %176 : vector<128xf32> to vector<1x128xf32>
    %178 = vector.broadcast %177 : vector<1x128xf32> to vector<16x128xf32>
    %179 = arith.mulf %178, %174 : vector<16x128xf32>
    %180 = arith.addf %151, %179 : vector<16x128xf32>
    %c4 = arith.constant 4 : index
    %c0_35 = arith.constant 0 : index
    %181 = arith.index_cast %4 : i32 to index
    %182 = vector.load %arg2[%c4, %c0_35, %181] : memref<16x16x128xi8, #tpu.memory_space<vmem>>, vector<1x16x128xi8>
    %183 = vector.shape_cast %182 : vector<1x16x128xi8> to vector<16x128xi8>
    %184 = arith.extsi %183 : vector<16x128xi8> to vector<16x128xi32>
    %c1_i32_36 = arith.constant 1 : i32
    %185 = vector.broadcast %c1_i32_36 : i32 to vector<16x128xi32>
    %186 = arith.andi %184, %185 : vector<16x128xi32>
    %c0_i32_37 = arith.constant 0 : i32
    %187 = vector.broadcast %c0_i32_37 : i32 to vector<16x128xi32>
    %188 = arith.cmpi ne, %186, %187 : vector<16x128xi32>
    %189 = arith.select %188, %32, %27 : vector<16x128xi1>, vector<16x128xf32>
    %190 = arith.select %188, %42, %37 : vector<16x128xi1>, vector<16x128xf32>
    %191 = arith.select %188, %52, %47 : vector<16x128xi1>, vector<16x128xf32>
    %192 = arith.select %188, %62, %57 : vector<16x128xi1>, vector<16x128xf32>
    %c2_i32_38 = arith.constant 2 : i32
    %193 = vector.broadcast %c2_i32_38 : i32 to vector<16x128xi32>
    %194 = arith.andi %184, %193 : vector<16x128xi32>
    %c0_i32_39 = arith.constant 0 : i32
    %195 = vector.broadcast %c0_i32_39 : i32 to vector<16x128xi32>
    %196 = arith.cmpi ne, %194, %195 : vector<16x128xi32>
    %197 = arith.select %196, %190, %189 : vector<16x128xi1>, vector<16x128xf32>
    %198 = arith.select %196, %192, %191 : vector<16x128xi1>, vector<16x128xf32>
    %c4_i32_40 = arith.constant 4 : i32
    %199 = vector.broadcast %c4_i32_40 : i32 to vector<16x128xi32>
    %200 = arith.andi %184, %199 : vector<16x128xi32>
    %c0_i32_41 = arith.constant 0 : i32
    %201 = vector.broadcast %c0_i32_41 : i32 to vector<16x128xi32>
    %202 = arith.cmpi ne, %200, %201 : vector<16x128xi32>
    %203 = arith.select %202, %198, %197 : vector<16x128xi1>, vector<16x128xf32>
    %204 = vector.extract_strided_slice %64 {offsets = [4, 0], sizes = [1, 128], strides = [1, 1]} : vector<16x128xf32> to vector<1x128xf32>
    %205 = vector.shape_cast %204 : vector<1x128xf32> to vector<128xf32>
    %206 = vector.shape_cast %205 : vector<128xf32> to vector<1x128xf32>
    %207 = vector.broadcast %206 : vector<1x128xf32> to vector<16x128xf32>
    %208 = arith.mulf %207, %203 : vector<16x128xf32>
    %209 = arith.addf %180, %208 : vector<16x128xf32>
    %c5 = arith.constant 5 : index
    %c0_42 = arith.constant 0 : index
    %210 = arith.index_cast %4 : i32 to index
    %211 = vector.load %arg2[%c5, %c0_42, %210] : memref<16x16x128xi8, #tpu.memory_space<vmem>>, vector<1x16x128xi8>
    %212 = vector.shape_cast %211 : vector<1x16x128xi8> to vector<16x128xi8>
    %213 = arith.extsi %212 : vector<16x128xi8> to vector<16x128xi32>
    %c1_i32_43 = arith.constant 1 : i32
    %214 = vector.broadcast %c1_i32_43 : i32 to vector<16x128xi32>
    %215 = arith.andi %213, %214 : vector<16x128xi32>
    %c0_i32_44 = arith.constant 0 : i32
    %216 = vector.broadcast %c0_i32_44 : i32 to vector<16x128xi32>
    %217 = arith.cmpi ne, %215, %216 : vector<16x128xi32>
    %218 = arith.select %217, %32, %27 : vector<16x128xi1>, vector<16x128xf32>
    %219 = arith.select %217, %42, %37 : vector<16x128xi1>, vector<16x128xf32>
    %220 = arith.select %217, %52, %47 : vector<16x128xi1>, vector<16x128xf32>
    %221 = arith.select %217, %62, %57 : vector<16x128xi1>, vector<16x128xf32>
    %c2_i32_45 = arith.constant 2 : i32
    %222 = vector.broadcast %c2_i32_45 : i32 to vector<16x128xi32>
    %223 = arith.andi %213, %222 : vector<16x128xi32>
    %c0_i32_46 = arith.constant 0 : i32
    %224 = vector.broadcast %c0_i32_46 : i32 to vector<16x128xi32>
    %225 = arith.cmpi ne, %223, %224 : vector<16x128xi32>
    %226 = arith.select %225, %219, %218 : vector<16x128xi1>, vector<16x128xf32>
    %227 = arith.select %225, %221, %220 : vector<16x128xi1>, vector<16x128xf32>
    %c4_i32_47 = arith.constant 4 : i32
    %228 = vector.broadcast %c4_i32_47 : i32 to vector<16x128xi32>
    %229 = arith.andi %213, %228 : vector<16x128xi32>
    %c0_i32_48 = arith.constant 0 : i32
    %230 = vector.broadcast %c0_i32_48 : i32 to vector<16x128xi32>
    %231 = arith.cmpi ne, %229, %230 : vector<16x128xi32>
    %232 = arith.select %231, %227, %226 : vector<16x128xi1>, vector<16x128xf32>
    %233 = vector.extract_strided_slice %64 {offsets = [5, 0], sizes = [1, 128], strides = [1, 1]} : vector<16x128xf32> to vector<1x128xf32>
    %234 = vector.shape_cast %233 : vector<1x128xf32> to vector<128xf32>
    %235 = vector.shape_cast %234 : vector<128xf32> to vector<1x128xf32>
    %236 = vector.broadcast %235 : vector<1x128xf32> to vector<16x128xf32>
    %237 = arith.mulf %236, %232 : vector<16x128xf32>
    %238 = arith.addf %209, %237 : vector<16x128xf32>
    %c6 = arith.constant 6 : index
    %c0_49 = arith.constant 0 : index
    %239 = arith.index_cast %4 : i32 to index
    %240 = vector.load %arg2[%c6, %c0_49, %239] : memref<16x16x128xi8, #tpu.memory_space<vmem>>, vector<1x16x128xi8>
    %241 = vector.shape_cast %240 : vector<1x16x128xi8> to vector<16x128xi8>
    %242 = arith.extsi %241 : vector<16x128xi8> to vector<16x128xi32>
    %c1_i32_50 = arith.constant 1 : i32
    %243 = vector.broadcast %c1_i32_50 : i32 to vector<16x128xi32>
    %244 = arith.andi %242, %243 : vector<16x128xi32>
    %c0_i32_51 = arith.constant 0 : i32
    %245 = vector.broadcast %c0_i32_51 : i32 to vector<16x128xi32>
    %246 = arith.cmpi ne, %244, %245 : vector<16x128xi32>
    %247 = arith.select %246, %32, %27 : vector<16x128xi1>, vector<16x128xf32>
    %248 = arith.select %246, %42, %37 : vector<16x128xi1>, vector<16x128xf32>
    %249 = arith.select %246, %52, %47 : vector<16x128xi1>, vector<16x128xf32>
    %250 = arith.select %246, %62, %57 : vector<16x128xi1>, vector<16x128xf32>
    %c2_i32_52 = arith.constant 2 : i32
    %251 = vector.broadcast %c2_i32_52 : i32 to vector<16x128xi32>
    %252 = arith.andi %242, %251 : vector<16x128xi32>
    %c0_i32_53 = arith.constant 0 : i32
    %253 = vector.broadcast %c0_i32_53 : i32 to vector<16x128xi32>
    %254 = arith.cmpi ne, %252, %253 : vector<16x128xi32>
    %255 = arith.select %254, %248, %247 : vector<16x128xi1>, vector<16x128xf32>
    %256 = arith.select %254, %250, %249 : vector<16x128xi1>, vector<16x128xf32>
    %c4_i32_54 = arith.constant 4 : i32
    %257 = vector.broadcast %c4_i32_54 : i32 to vector<16x128xi32>
    %258 = arith.andi %242, %257 : vector<16x128xi32>
    %c0_i32_55 = arith.constant 0 : i32
    %259 = vector.broadcast %c0_i32_55 : i32 to vector<16x128xi32>
    %260 = arith.cmpi ne, %258, %259 : vector<16x128xi32>
    %261 = arith.select %260, %256, %255 : vector<16x128xi1>, vector<16x128xf32>
    %262 = vector.extract_strided_slice %64 {offsets = [6, 0], sizes = [1, 128], strides = [1, 1]} : vector<16x128xf32> to vector<1x128xf32>
    %263 = vector.shape_cast %262 : vector<1x128xf32> to vector<128xf32>
    %264 = vector.shape_cast %263 : vector<128xf32> to vector<1x128xf32>
    %265 = vector.broadcast %264 : vector<1x128xf32> to vector<16x128xf32>
    %266 = arith.mulf %265, %261 : vector<16x128xf32>
    %267 = arith.addf %238, %266 : vector<16x128xf32>
    %c7 = arith.constant 7 : index
    %c0_56 = arith.constant 0 : index
    %268 = arith.index_cast %4 : i32 to index
    %269 = vector.load %arg2[%c7, %c0_56, %268] : memref<16x16x128xi8, #tpu.memory_space<vmem>>, vector<1x16x128xi8>
    %270 = vector.shape_cast %269 : vector<1x16x128xi8> to vector<16x128xi8>
    %271 = arith.extsi %270 : vector<16x128xi8> to vector<16x128xi32>
    %c1_i32_57 = arith.constant 1 : i32
    %272 = vector.broadcast %c1_i32_57 : i32 to vector<16x128xi32>
    %273 = arith.andi %271, %272 : vector<16x128xi32>
    %c0_i32_58 = arith.constant 0 : i32
    %274 = vector.broadcast %c0_i32_58 : i32 to vector<16x128xi32>
    %275 = arith.cmpi ne, %273, %274 : vector<16x128xi32>
    %276 = arith.select %275, %32, %27 : vector<16x128xi1>, vector<16x128xf32>
    %277 = arith.select %275, %42, %37 : vector<16x128xi1>, vector<16x128xf32>
    %278 = arith.select %275, %52, %47 : vector<16x128xi1>, vector<16x128xf32>
    %279 = arith.select %275, %62, %57 : vector<16x128xi1>, vector<16x128xf32>
    %c2_i32_59 = arith.constant 2 : i32
    %280 = vector.broadcast %c2_i32_59 : i32 to vector<16x128xi32>
    %281 = arith.andi %271, %280 : vector<16x128xi32>
    %c0_i32_60 = arith.constant 0 : i32
    %282 = vector.broadcast %c0_i32_60 : i32 to vector<16x128xi32>
    %283 = arith.cmpi ne, %281, %282 : vector<16x128xi32>
    %284 = arith.select %283, %277, %276 : vector<16x128xi1>, vector<16x128xf32>
    %285 = arith.select %283, %279, %278 : vector<16x128xi1>, vector<16x128xf32>
    %c4_i32_61 = arith.constant 4 : i32
    %286 = vector.broadcast %c4_i32_61 : i32 to vector<16x128xi32>
    %287 = arith.andi %271, %286 : vector<16x128xi32>
    %c0_i32_62 = arith.constant 0 : i32
    %288 = vector.broadcast %c0_i32_62 : i32 to vector<16x128xi32>
    %289 = arith.cmpi ne, %287, %288 : vector<16x128xi32>
    %290 = arith.select %289, %285, %284 : vector<16x128xi1>, vector<16x128xf32>
    %291 = vector.extract_strided_slice %64 {offsets = [7, 0], sizes = [1, 128], strides = [1, 1]} : vector<16x128xf32> to vector<1x128xf32>
    %292 = vector.shape_cast %291 : vector<1x128xf32> to vector<128xf32>
    %293 = vector.shape_cast %292 : vector<128xf32> to vector<1x128xf32>
    %294 = vector.broadcast %293 : vector<1x128xf32> to vector<16x128xf32>
    %295 = arith.mulf %294, %290 : vector<16x128xf32>
    %296 = arith.addf %267, %295 : vector<16x128xf32>
    %c8 = arith.constant 8 : index
    %c0_63 = arith.constant 0 : index
    %297 = arith.index_cast %4 : i32 to index
    %298 = vector.load %arg2[%c8, %c0_63, %297] : memref<16x16x128xi8, #tpu.memory_space<vmem>>, vector<1x16x128xi8>
    %299 = vector.shape_cast %298 : vector<1x16x128xi8> to vector<16x128xi8>
    %300 = arith.extsi %299 : vector<16x128xi8> to vector<16x128xi32>
    %c1_i32_64 = arith.constant 1 : i32
    %301 = vector.broadcast %c1_i32_64 : i32 to vector<16x128xi32>
    %302 = arith.andi %300, %301 : vector<16x128xi32>
    %c0_i32_65 = arith.constant 0 : i32
    %303 = vector.broadcast %c0_i32_65 : i32 to vector<16x128xi32>
    %304 = arith.cmpi ne, %302, %303 : vector<16x128xi32>
    %305 = arith.select %304, %32, %27 : vector<16x128xi1>, vector<16x128xf32>
    %306 = arith.select %304, %42, %37 : vector<16x128xi1>, vector<16x128xf32>
    %307 = arith.select %304, %52, %47 : vector<16x128xi1>, vector<16x128xf32>
    %308 = arith.select %304, %62, %57 : vector<16x128xi1>, vector<16x128xf32>
    %c2_i32_66 = arith.constant 2 : i32
    %309 = vector.broadcast %c2_i32_66 : i32 to vector<16x128xi32>
    %310 = arith.andi %300, %309 : vector<16x128xi32>
    %c0_i32_67 = arith.constant 0 : i32
    %311 = vector.broadcast %c0_i32_67 : i32 to vector<16x128xi32>
    %312 = arith.cmpi ne, %310, %311 : vector<16x128xi32>
    %313 = arith.select %312, %306, %305 : vector<16x128xi1>, vector<16x128xf32>
    %314 = arith.select %312, %308, %307 : vector<16x128xi1>, vector<16x128xf32>
    %c4_i32_68 = arith.constant 4 : i32
    %315 = vector.broadcast %c4_i32_68 : i32 to vector<16x128xi32>
    %316 = arith.andi %300, %315 : vector<16x128xi32>
    %c0_i32_69 = arith.constant 0 : i32
    %317 = vector.broadcast %c0_i32_69 : i32 to vector<16x128xi32>
    %318 = arith.cmpi ne, %316, %317 : vector<16x128xi32>
    %319 = arith.select %318, %314, %313 : vector<16x128xi1>, vector<16x128xf32>
    %320 = vector.extract_strided_slice %64 {offsets = [8, 0], sizes = [1, 128], strides = [1, 1]} : vector<16x128xf32> to vector<1x128xf32>
    %321 = vector.shape_cast %320 : vector<1x128xf32> to vector<128xf32>
    %322 = vector.shape_cast %321 : vector<128xf32> to vector<1x128xf32>
    %323 = vector.broadcast %322 : vector<1x128xf32> to vector<16x128xf32>
    %324 = arith.mulf %323, %319 : vector<16x128xf32>
    %325 = arith.addf %296, %324 : vector<16x128xf32>
    %c9 = arith.constant 9 : index
    %c0_70 = arith.constant 0 : index
    %326 = arith.index_cast %4 : i32 to index
    %327 = vector.load %arg2[%c9, %c0_70, %326] : memref<16x16x128xi8, #tpu.memory_space<vmem>>, vector<1x16x128xi8>
    %328 = vector.shape_cast %327 : vector<1x16x128xi8> to vector<16x128xi8>
    %329 = arith.extsi %328 : vector<16x128xi8> to vector<16x128xi32>
    %c1_i32_71 = arith.constant 1 : i32
    %330 = vector.broadcast %c1_i32_71 : i32 to vector<16x128xi32>
    %331 = arith.andi %329, %330 : vector<16x128xi32>
    %c0_i32_72 = arith.constant 0 : i32
    %332 = vector.broadcast %c0_i32_72 : i32 to vector<16x128xi32>
    %333 = arith.cmpi ne, %331, %332 : vector<16x128xi32>
    %334 = arith.select %333, %32, %27 : vector<16x128xi1>, vector<16x128xf32>
    %335 = arith.select %333, %42, %37 : vector<16x128xi1>, vector<16x128xf32>
    %336 = arith.select %333, %52, %47 : vector<16x128xi1>, vector<16x128xf32>
    %337 = arith.select %333, %62, %57 : vector<16x128xi1>, vector<16x128xf32>
    %c2_i32_73 = arith.constant 2 : i32
    %338 = vector.broadcast %c2_i32_73 : i32 to vector<16x128xi32>
    %339 = arith.andi %329, %338 : vector<16x128xi32>
    %c0_i32_74 = arith.constant 0 : i32
    %340 = vector.broadcast %c0_i32_74 : i32 to vector<16x128xi32>
    %341 = arith.cmpi ne, %339, %340 : vector<16x128xi32>
    %342 = arith.select %341, %335, %334 : vector<16x128xi1>, vector<16x128xf32>
    %343 = arith.select %341, %337, %336 : vector<16x128xi1>, vector<16x128xf32>
    %c4_i32_75 = arith.constant 4 : i32
    %344 = vector.broadcast %c4_i32_75 : i32 to vector<16x128xi32>
    %345 = arith.andi %329, %344 : vector<16x128xi32>
    %c0_i32_76 = arith.constant 0 : i32
    %346 = vector.broadcast %c0_i32_76 : i32 to vector<16x128xi32>
    %347 = arith.cmpi ne, %345, %346 : vector<16x128xi32>
    %348 = arith.select %347, %343, %342 : vector<16x128xi1>, vector<16x128xf32>
    %349 = vector.extract_strided_slice %64 {offsets = [9, 0], sizes = [1, 128], strides = [1, 1]} : vector<16x128xf32> to vector<1x128xf32>
    %350 = vector.shape_cast %349 : vector<1x128xf32> to vector<128xf32>
    %351 = vector.shape_cast %350 : vector<128xf32> to vector<1x128xf32>
    %352 = vector.broadcast %351 : vector<1x128xf32> to vector<16x128xf32>
    %353 = arith.mulf %352, %348 : vector<16x128xf32>
    %354 = arith.addf %325, %353 : vector<16x128xf32>
    %c10 = arith.constant 10 : index
    %c0_77 = arith.constant 0 : index
    %355 = arith.index_cast %4 : i32 to index
    %356 = vector.load %arg2[%c10, %c0_77, %355] : memref<16x16x128xi8, #tpu.memory_space<vmem>>, vector<1x16x128xi8>
    %357 = vector.shape_cast %356 : vector<1x16x128xi8> to vector<16x128xi8>
    %358 = arith.extsi %357 : vector<16x128xi8> to vector<16x128xi32>
    %c1_i32_78 = arith.constant 1 : i32
    %359 = vector.broadcast %c1_i32_78 : i32 to vector<16x128xi32>
    %360 = arith.andi %358, %359 : vector<16x128xi32>
    %c0_i32_79 = arith.constant 0 : i32
    %361 = vector.broadcast %c0_i32_79 : i32 to vector<16x128xi32>
    %362 = arith.cmpi ne, %360, %361 : vector<16x128xi32>
    %363 = arith.select %362, %32, %27 : vector<16x128xi1>, vector<16x128xf32>
    %364 = arith.select %362, %42, %37 : vector<16x128xi1>, vector<16x128xf32>
    %365 = arith.select %362, %52, %47 : vector<16x128xi1>, vector<16x128xf32>
    %366 = arith.select %362, %62, %57 : vector<16x128xi1>, vector<16x128xf32>
    %c2_i32_80 = arith.constant 2 : i32
    %367 = vector.broadcast %c2_i32_80 : i32 to vector<16x128xi32>
    %368 = arith.andi %358, %367 : vector<16x128xi32>
    %c0_i32_81 = arith.constant 0 : i32
    %369 = vector.broadcast %c0_i32_81 : i32 to vector<16x128xi32>
    %370 = arith.cmpi ne, %368, %369 : vector<16x128xi32>
    %371 = arith.select %370, %364, %363 : vector<16x128xi1>, vector<16x128xf32>
    %372 = arith.select %370, %366, %365 : vector<16x128xi1>, vector<16x128xf32>
    %c4_i32_82 = arith.constant 4 : i32
    %373 = vector.broadcast %c4_i32_82 : i32 to vector<16x128xi32>
    %374 = arith.andi %358, %373 : vector<16x128xi32>
    %c0_i32_83 = arith.constant 0 : i32
    %375 = vector.broadcast %c0_i32_83 : i32 to vector<16x128xi32>
    %376 = arith.cmpi ne, %374, %375 : vector<16x128xi32>
    %377 = arith.select %376, %372, %371 : vector<16x128xi1>, vector<16x128xf32>
    %378 = vector.extract_strided_slice %64 {offsets = [10, 0], sizes = [1, 128], strides = [1, 1]} : vector<16x128xf32> to vector<1x128xf32>
    %379 = vector.shape_cast %378 : vector<1x128xf32> to vector<128xf32>
    %380 = vector.shape_cast %379 : vector<128xf32> to vector<1x128xf32>
    %381 = vector.broadcast %380 : vector<1x128xf32> to vector<16x128xf32>
    %382 = arith.mulf %381, %377 : vector<16x128xf32>
    %383 = arith.addf %354, %382 : vector<16x128xf32>
    %c11 = arith.constant 11 : index
    %c0_84 = arith.constant 0 : index
    %384 = arith.index_cast %4 : i32 to index
    %385 = vector.load %arg2[%c11, %c0_84, %384] : memref<16x16x128xi8, #tpu.memory_space<vmem>>, vector<1x16x128xi8>
    %386 = vector.shape_cast %385 : vector<1x16x128xi8> to vector<16x128xi8>
    %387 = arith.extsi %386 : vector<16x128xi8> to vector<16x128xi32>
    %c1_i32_85 = arith.constant 1 : i32
    %388 = vector.broadcast %c1_i32_85 : i32 to vector<16x128xi32>
    %389 = arith.andi %387, %388 : vector<16x128xi32>
    %c0_i32_86 = arith.constant 0 : i32
    %390 = vector.broadcast %c0_i32_86 : i32 to vector<16x128xi32>
    %391 = arith.cmpi ne, %389, %390 : vector<16x128xi32>
    %392 = arith.select %391, %32, %27 : vector<16x128xi1>, vector<16x128xf32>
    %393 = arith.select %391, %42, %37 : vector<16x128xi1>, vector<16x128xf32>
    %394 = arith.select %391, %52, %47 : vector<16x128xi1>, vector<16x128xf32>
    %395 = arith.select %391, %62, %57 : vector<16x128xi1>, vector<16x128xf32>
    %c2_i32_87 = arith.constant 2 : i32
    %396 = vector.broadcast %c2_i32_87 : i32 to vector<16x128xi32>
    %397 = arith.andi %387, %396 : vector<16x128xi32>
    %c0_i32_88 = arith.constant 0 : i32
    %398 = vector.broadcast %c0_i32_88 : i32 to vector<16x128xi32>
    %399 = arith.cmpi ne, %397, %398 : vector<16x128xi32>
    %400 = arith.select %399, %393, %392 : vector<16x128xi1>, vector<16x128xf32>
    %401 = arith.select %399, %395, %394 : vector<16x128xi1>, vector<16x128xf32>
    %c4_i32_89 = arith.constant 4 : i32
    %402 = vector.broadcast %c4_i32_89 : i32 to vector<16x128xi32>
    %403 = arith.andi %387, %402 : vector<16x128xi32>
    %c0_i32_90 = arith.constant 0 : i32
    %404 = vector.broadcast %c0_i32_90 : i32 to vector<16x128xi32>
    %405 = arith.cmpi ne, %403, %404 : vector<16x128xi32>
    %406 = arith.select %405, %401, %400 : vector<16x128xi1>, vector<16x128xf32>
    %407 = vector.extract_strided_slice %64 {offsets = [11, 0], sizes = [1, 128], strides = [1, 1]} : vector<16x128xf32> to vector<1x128xf32>
    %408 = vector.shape_cast %407 : vector<1x128xf32> to vector<128xf32>
    %409 = vector.shape_cast %408 : vector<128xf32> to vector<1x128xf32>
    %410 = vector.broadcast %409 : vector<1x128xf32> to vector<16x128xf32>
    %411 = arith.mulf %410, %406 : vector<16x128xf32>
    %412 = arith.addf %383, %411 : vector<16x128xf32>
    %c12 = arith.constant 12 : index
    %c0_91 = arith.constant 0 : index
    %413 = arith.index_cast %4 : i32 to index
    %414 = vector.load %arg2[%c12, %c0_91, %413] : memref<16x16x128xi8, #tpu.memory_space<vmem>>, vector<1x16x128xi8>
    %415 = vector.shape_cast %414 : vector<1x16x128xi8> to vector<16x128xi8>
    %416 = arith.extsi %415 : vector<16x128xi8> to vector<16x128xi32>
    %c1_i32_92 = arith.constant 1 : i32
    %417 = vector.broadcast %c1_i32_92 : i32 to vector<16x128xi32>
    %418 = arith.andi %416, %417 : vector<16x128xi32>
    %c0_i32_93 = arith.constant 0 : i32
    %419 = vector.broadcast %c0_i32_93 : i32 to vector<16x128xi32>
    %420 = arith.cmpi ne, %418, %419 : vector<16x128xi32>
    %421 = arith.select %420, %32, %27 : vector<16x128xi1>, vector<16x128xf32>
    %422 = arith.select %420, %42, %37 : vector<16x128xi1>, vector<16x128xf32>
    %423 = arith.select %420, %52, %47 : vector<16x128xi1>, vector<16x128xf32>
    %424 = arith.select %420, %62, %57 : vector<16x128xi1>, vector<16x128xf32>
    %c2_i32_94 = arith.constant 2 : i32
    %425 = vector.broadcast %c2_i32_94 : i32 to vector<16x128xi32>
    %426 = arith.andi %416, %425 : vector<16x128xi32>
    %c0_i32_95 = arith.constant 0 : i32
    %427 = vector.broadcast %c0_i32_95 : i32 to vector<16x128xi32>
    %428 = arith.cmpi ne, %426, %427 : vector<16x128xi32>
    %429 = arith.select %428, %422, %421 : vector<16x128xi1>, vector<16x128xf32>
    %430 = arith.select %428, %424, %423 : vector<16x128xi1>, vector<16x128xf32>
    %c4_i32_96 = arith.constant 4 : i32
    %431 = vector.broadcast %c4_i32_96 : i32 to vector<16x128xi32>
    %432 = arith.andi %416, %431 : vector<16x128xi32>
    %c0_i32_97 = arith.constant 0 : i32
    %433 = vector.broadcast %c0_i32_97 : i32 to vector<16x128xi32>
    %434 = arith.cmpi ne, %432, %433 : vector<16x128xi32>
    %435 = arith.select %434, %430, %429 : vector<16x128xi1>, vector<16x128xf32>
    %436 = vector.extract_strided_slice %64 {offsets = [12, 0], sizes = [1, 128], strides = [1, 1]} : vector<16x128xf32> to vector<1x128xf32>
    %437 = vector.shape_cast %436 : vector<1x128xf32> to vector<128xf32>
    %438 = vector.shape_cast %437 : vector<128xf32> to vector<1x128xf32>
    %439 = vector.broadcast %438 : vector<1x128xf32> to vector<16x128xf32>
    %440 = arith.mulf %439, %435 : vector<16x128xf32>
    %441 = arith.addf %412, %440 : vector<16x128xf32>
    %c13 = arith.constant 13 : index
    %c0_98 = arith.constant 0 : index
    %442 = arith.index_cast %4 : i32 to index
    %443 = vector.load %arg2[%c13, %c0_98, %442] : memref<16x16x128xi8, #tpu.memory_space<vmem>>, vector<1x16x128xi8>
    %444 = vector.shape_cast %443 : vector<1x16x128xi8> to vector<16x128xi8>
    %445 = arith.extsi %444 : vector<16x128xi8> to vector<16x128xi32>
    %c1_i32_99 = arith.constant 1 : i32
    %446 = vector.broadcast %c1_i32_99 : i32 to vector<16x128xi32>
    %447 = arith.andi %445, %446 : vector<16x128xi32>
    %c0_i32_100 = arith.constant 0 : i32
    %448 = vector.broadcast %c0_i32_100 : i32 to vector<16x128xi32>
    %449 = arith.cmpi ne, %447, %448 : vector<16x128xi32>
    %450 = arith.select %449, %32, %27 : vector<16x128xi1>, vector<16x128xf32>
    %451 = arith.select %449, %42, %37 : vector<16x128xi1>, vector<16x128xf32>
    %452 = arith.select %449, %52, %47 : vector<16x128xi1>, vector<16x128xf32>
    %453 = arith.select %449, %62, %57 : vector<16x128xi1>, vector<16x128xf32>
    %c2_i32_101 = arith.constant 2 : i32
    %454 = vector.broadcast %c2_i32_101 : i32 to vector<16x128xi32>
    %455 = arith.andi %445, %454 : vector<16x128xi32>
    %c0_i32_102 = arith.constant 0 : i32
    %456 = vector.broadcast %c0_i32_102 : i32 to vector<16x128xi32>
    %457 = arith.cmpi ne, %455, %456 : vector<16x128xi32>
    %458 = arith.select %457, %451, %450 : vector<16x128xi1>, vector<16x128xf32>
    %459 = arith.select %457, %453, %452 : vector<16x128xi1>, vector<16x128xf32>
    %c4_i32_103 = arith.constant 4 : i32
    %460 = vector.broadcast %c4_i32_103 : i32 to vector<16x128xi32>
    %461 = arith.andi %445, %460 : vector<16x128xi32>
    %c0_i32_104 = arith.constant 0 : i32
    %462 = vector.broadcast %c0_i32_104 : i32 to vector<16x128xi32>
    %463 = arith.cmpi ne, %461, %462 : vector<16x128xi32>
    %464 = arith.select %463, %459, %458 : vector<16x128xi1>, vector<16x128xf32>
    %465 = vector.extract_strided_slice %64 {offsets = [13, 0], sizes = [1, 128], strides = [1, 1]} : vector<16x128xf32> to vector<1x128xf32>
    %466 = vector.shape_cast %465 : vector<1x128xf32> to vector<128xf32>
    %467 = vector.shape_cast %466 : vector<128xf32> to vector<1x128xf32>
    %468 = vector.broadcast %467 : vector<1x128xf32> to vector<16x128xf32>
    %469 = arith.mulf %468, %464 : vector<16x128xf32>
    %470 = arith.addf %441, %469 : vector<16x128xf32>
    %c14 = arith.constant 14 : index
    %c0_105 = arith.constant 0 : index
    %471 = arith.index_cast %4 : i32 to index
    %472 = vector.load %arg2[%c14, %c0_105, %471] : memref<16x16x128xi8, #tpu.memory_space<vmem>>, vector<1x16x128xi8>
    %473 = vector.shape_cast %472 : vector<1x16x128xi8> to vector<16x128xi8>
    %474 = arith.extsi %473 : vector<16x128xi8> to vector<16x128xi32>
    %c1_i32_106 = arith.constant 1 : i32
    %475 = vector.broadcast %c1_i32_106 : i32 to vector<16x128xi32>
    %476 = arith.andi %474, %475 : vector<16x128xi32>
    %c0_i32_107 = arith.constant 0 : i32
    %477 = vector.broadcast %c0_i32_107 : i32 to vector<16x128xi32>
    %478 = arith.cmpi ne, %476, %477 : vector<16x128xi32>
    %479 = arith.select %478, %32, %27 : vector<16x128xi1>, vector<16x128xf32>
    %480 = arith.select %478, %42, %37 : vector<16x128xi1>, vector<16x128xf32>
    %481 = arith.select %478, %52, %47 : vector<16x128xi1>, vector<16x128xf32>
    %482 = arith.select %478, %62, %57 : vector<16x128xi1>, vector<16x128xf32>
    %c2_i32_108 = arith.constant 2 : i32
    %483 = vector.broadcast %c2_i32_108 : i32 to vector<16x128xi32>
    %484 = arith.andi %474, %483 : vector<16x128xi32>
    %c0_i32_109 = arith.constant 0 : i32
    %485 = vector.broadcast %c0_i32_109 : i32 to vector<16x128xi32>
    %486 = arith.cmpi ne, %484, %485 : vector<16x128xi32>
    %487 = arith.select %486, %480, %479 : vector<16x128xi1>, vector<16x128xf32>
    %488 = arith.select %486, %482, %481 : vector<16x128xi1>, vector<16x128xf32>
    %c4_i32_110 = arith.constant 4 : i32
    %489 = vector.broadcast %c4_i32_110 : i32 to vector<16x128xi32>
    %490 = arith.andi %474, %489 : vector<16x128xi32>
    %c0_i32_111 = arith.constant 0 : i32
    %491 = vector.broadcast %c0_i32_111 : i32 to vector<16x128xi32>
    %492 = arith.cmpi ne, %490, %491 : vector<16x128xi32>
    %493 = arith.select %492, %488, %487 : vector<16x128xi1>, vector<16x128xf32>
    %494 = vector.extract_strided_slice %64 {offsets = [14, 0], sizes = [1, 128], strides = [1, 1]} : vector<16x128xf32> to vector<1x128xf32>
    %495 = vector.shape_cast %494 : vector<1x128xf32> to vector<128xf32>
    %496 = vector.shape_cast %495 : vector<128xf32> to vector<1x128xf32>
    %497 = vector.broadcast %496 : vector<1x128xf32> to vector<16x128xf32>
    %498 = arith.mulf %497, %493 : vector<16x128xf32>
    %499 = arith.addf %470, %498 : vector<16x128xf32>
    %c15 = arith.constant 15 : index
    %c0_112 = arith.constant 0 : index
    %500 = arith.index_cast %4 : i32 to index
    %501 = vector.load %arg2[%c15, %c0_112, %500] : memref<16x16x128xi8, #tpu.memory_space<vmem>>, vector<1x16x128xi8>
    %502 = vector.shape_cast %501 : vector<1x16x128xi8> to vector<16x128xi8>
    %503 = arith.extsi %502 : vector<16x128xi8> to vector<16x128xi32>
    %c1_i32_113 = arith.constant 1 : i32
    %504 = vector.broadcast %c1_i32_113 : i32 to vector<16x128xi32>
    %505 = arith.andi %503, %504 : vector<16x128xi32>
    %c0_i32_114 = arith.constant 0 : i32
    %506 = vector.broadcast %c0_i32_114 : i32 to vector<16x128xi32>
    %507 = arith.cmpi ne, %505, %506 : vector<16x128xi32>
    %508 = arith.select %507, %32, %27 : vector<16x128xi1>, vector<16x128xf32>
    %509 = arith.select %507, %42, %37 : vector<16x128xi1>, vector<16x128xf32>
    %510 = arith.select %507, %52, %47 : vector<16x128xi1>, vector<16x128xf32>
    %511 = arith.select %507, %62, %57 : vector<16x128xi1>, vector<16x128xf32>
    %c2_i32_115 = arith.constant 2 : i32
    %512 = vector.broadcast %c2_i32_115 : i32 to vector<16x128xi32>
    %513 = arith.andi %503, %512 : vector<16x128xi32>
    %c0_i32_116 = arith.constant 0 : i32
    %514 = vector.broadcast %c0_i32_116 : i32 to vector<16x128xi32>
    %515 = arith.cmpi ne, %513, %514 : vector<16x128xi32>
    %516 = arith.select %515, %509, %508 : vector<16x128xi1>, vector<16x128xf32>
    %517 = arith.select %515, %511, %510 : vector<16x128xi1>, vector<16x128xf32>
    %c4_i32_117 = arith.constant 4 : i32
    %518 = vector.broadcast %c4_i32_117 : i32 to vector<16x128xi32>
    %519 = arith.andi %503, %518 : vector<16x128xi32>
    %c0_i32_118 = arith.constant 0 : i32
    %520 = vector.broadcast %c0_i32_118 : i32 to vector<16x128xi32>
    %521 = arith.cmpi ne, %519, %520 : vector<16x128xi32>
    %522 = arith.select %521, %517, %516 : vector<16x128xi1>, vector<16x128xf32>
    %523 = vector.extract_strided_slice %64 {offsets = [15, 0], sizes = [1, 128], strides = [1, 1]} : vector<16x128xf32> to vector<1x128xf32>
    %524 = vector.shape_cast %523 : vector<1x128xf32> to vector<128xf32>
    %525 = vector.shape_cast %524 : vector<128xf32> to vector<1x128xf32>
    %526 = vector.broadcast %525 : vector<1x128xf32> to vector<16x128xf32>
    %527 = arith.mulf %526, %522 : vector<16x128xf32>
    %528 = arith.addf %499, %527 : vector<16x128xf32>
    %c0_119 = arith.constant 0 : index
    %529 = arith.index_cast %4 : i32 to index
    %530 = vector.load %arg5[%c0_119, %529] : memref<16x128xf32, #tpu.memory_space<vmem>>, vector<16x128xf32>
    tpu.vector_store %arg5[%c0_119, %529], %528 {strides = array<i32>} : memref<16x128xf32, #tpu.memory_space<vmem>>, vector<16x128xf32>,
    %c1_i32_120 = arith.constant 1 : i32
    return
  }
  func.func @transform_0(%arg0: i32) -> (i32, i32) {
    %c0_i32 = arith.constant 0 : i32
    %c0_i32_0 = arith.constant 0 : i32
    return %c0_i32, %arg0 : i32, i32
  }
  func.func @transform_1(%arg0: i32) -> (i32, i32, i32) {
    %c0_i32 = arith.constant 0 : i32
    %c0_i32_0 = arith.constant 0 : i32
    %c0_i32_1 = arith.constant 0 : i32
    return %c0_i32, %c0_i32_0, %arg0 : i32, i32, i32
  }
  func.func @transform_2(%arg0: i32) -> (i32, i32) {
    %c0_i32 = arith.constant 0 : i32
    %c0_i32_0 = arith.constant 0 : i32
    return %c0_i32, %arg0 : i32, i32
  }
  func.func @transform_3(%arg0: i32) -> (i32, i32) {
    %c0_i32 = arith.constant 0 : i32
    %c0_i32_0 = arith.constant 0 : i32
    %c0_i32_1 = arith.constant 0 : i32
    return %c0_i32, %c0_i32_0 : i32, i32
  }
  func.func @transform_4(%arg0: i32) -> (i32, i32) {
    %c0_i32 = arith.constant 0 : i32
    %c0_i32_0 = arith.constant 0 : i32
    return %c0_i32, %arg0 : i32, i32
  }
}

</mosaic_0001>

<llo_original>
// kernel: relate_module_batched.1
$region0: #{relate_module_batched.1}
  #allocation0 [shape = 'u32[]', space=smem, size = 0x4, offset = 0x4, fixed_abs, tag = 'smem constant byte address 0x4 - core index']
  #allocation1 [shape = 'u32[72,128]{1,0:T(1,128)}', space=vmem, size = 0x9000, scoped, tag = 'internal scratch']
  %s0 = inlined_call_operand.vmem [shape: f32[16,256], index: 0, kind: input, shape index: {}]
  %s1 = inlined_call_operand.vmem [shape: s8[16,16,256], index: 1, kind: input, shape index: {}]
  %s2 = inlined_call_operand.vmem [shape: f32[32,256], index: 2, kind: input, shape index: {}]
  %s3 = inlined_call_operand.vmem [shape: f32[8,32], index: 3, kind: input, shape index: {}]
  %s4 = inlined_call_operand.hbm [shape: f32[16,256], index: 4, kind: output, shape index: {}]
  %s5 = sld [smem:[#allocation0]]
  $region166: #{relate_module_batched.1} parent=0
    _
  %s7 = ssub.s32 1, %s5
  %s8 = scalar_select 0, %s7, %s5
  $region1: #{relate_module_batched.1} parent=0
    #allocation2 [shape = 'u8[16384]{0}', space=vmem, size = 0x4000, scoped, tag = 'input window, operand 0']
    #allocation3 [shape = 'u8[65536]{0}', space=vmem, size = 0x10000, scoped, tag = 'input window, operand 1']
    #allocation4 [shape = 'u8[32768]{0}', space=vmem, size = 0x8000, scoped, tag = 'input window, operand 2']
    #allocation5 [shape = 'u8[16384]{0}', space=vmem, size = 0x4000, scoped, tag = 'output window, operand 0']
    #allocation6 [shape = 's32[2]{0}', space=sflag, size = 0x8, scoped, tag = 'scoped memory for relate_module_batched.1']
    %9 = vsyncpa [#allocation6], 0
    %s10 = scalar_lea.sflag [#allocation6], 1
    %11 = vsyncpa %s10, 0
    loop: start=0, step=1, limit=4
    $region2: #{relate_module_batched.1} parent=1 // loop_pre_header
      _
    $region3: #{relate_module_batched.1} parent=1 // loop_header
      %s13 = sphi 0, %s17
      %p14 = scmp.ge.s32.totalorder %s13, 4
      %s23 = sphi 0, %s25
      %s26 = sphi 0, %s23
      %s27 = sphi 0, %s26
      %s43 = sphi 0, %s27
      %s49 = sphi 0, %s51
      %s52 = sphi 0, %s49
      %s53 = sphi 0, %s52
      %s69 = sphi 0, %s53
      %s75 = sphi 0, %s77
      %s78 = sphi 0, %s75
      %s79 = sphi 0, %s78
      %s95 = sphi 0, %s79
      %s99 = sphi 0, %s99
      %s101 = sphi 0, %s99
      %s102 = sphi 0, %s101
      %s116 = sphi 0, %s102
      %s122 = sphi 0, %s124
      %s125 = sphi 0, %s122
      %s126 = sphi 0, %s125
      %s142 = sphi 0, %s126
    $region4: #{relate_module_batched.1} parent=1 // loop_header_branch
      %16 = sbr.rel (%p14) target = $region8
    $region5: #{relate_module_batched.1} parent=1 // loop_body
      %s18 = ssub.s32 %s13, 1
      %s19 = ssub.s32 %s13, 2
      %s20 = sadd.s32 %s13, 1
      %s21 = ssub.s32 %s13, %s20
      %p22 = scmp.eq.s32.totalorder %s21, 0
      %s24 = sadd.s32 %s23, 1
      %s25 = scalar_select %p22, %s23, %s24
      %p28 = pneg %p22
      %p29 = scmp.eq.s32.totalorder %s13, 1
      %p30 = por %p28, %p29
      %p31 = scmp.ne.s32.totalorder %s23, %s26
      %p32 = scmp.eq.s32.totalorder %s13, 0
      %p33 = por %p31, %p32
      %p34 = scmp.ne.s32.totalorder %s23, %s26
      %p35 = scmp.eq.s32.totalorder %s18, 1
      %p36 = por %p34, %p35
      %p37 = scmp.ne.s32.totalorder %s26, %s27
      %p38 = scmp.eq.s32.totalorder %s18, 0
      %p39 = por %p37, %p38
      %p40 = scmp.ne.s32.totalorder %s26, %s27
      %p41 = scmp.eq.s32.totalorder %s19, 1
      %p42 = por %p40, %p41
      %p44 = scmp.ne.s32.totalorder %s27, %s43
      %p45 = scmp.eq.s32.totalorder %s19, 0
      %p46 = por %p44, %p45
      %s47 = ssub.s32 %s13, %s20
      %p48 = scmp.eq.s32.totalorder %s47, 0
      %s50 = sadd.s32 %s49, 1
      %s51 = scalar_select %p48, %s49, %s50
      %p54 = pneg %p48
      %p55 = scmp.eq.s32.totalorder %s13, 1
      %p56 = por %p54, %p55
      %p57 = scmp.ne.s32.totalorder %s49, %s52
      %p58 = scmp.eq.s32.totalorder %s13, 0
      %p59 = por %p57, %p58
      %p60 = scmp.ne.s32.totalorder %s49, %s52
      %p61 = scmp.eq.s32.totalorder %s18, 1
      %p62 = por %p60, %p61
      %p63 = scmp.ne.s32.totalorder %s52, %s53
      %p64 = scmp.eq.s32.totalorder %s18, 0
      %p65 = por %p63, %p64
      %p66 = scmp.ne.s32.totalorder %s52, %s53
      %p67 = scmp.eq.s32.totalorder %s19, 1
      %p68 = por %p66, %p67
      %p70 = scmp.ne.s32.totalorder %s53, %s69
      %p71 = scmp.eq.s32.totalorder %s19, 0
      %p72 = por %p70, %p71
      %s73 = ssub.s32 %s13, %s20
      %p74 = scmp.eq.s32.totalorder %s73, 0
      %s76 = sadd.s32 %s75, 1
      %s77 = scalar_select %p74, %s75, %s76
      %p80 = pneg %p74
      %p81 = scmp.eq.s32.totalorder %s13, 1
      %p82 = por %p80, %p81
      %p83 = scmp.ne.s32.totalorder %s75, %s78
      %p84 = scmp.eq.s32.totalorder %s13, 0
      %p85 = por %p83, %p84
      %p86 = scmp.ne.s32.totalorder %s75, %s78
      %p87 = scmp.eq.s32.totalorder %s18, 1
      %p88 = por %p86, %p87
      %p89 = scmp.ne.s32.totalorder %s78, %s79
      %p90 = scmp.eq.s32.totalorder %s18, 0
      %p91 = por %p89, %p90
      %p92 = scmp.ne.s32.totalorder %s78, %s79
      %p93 = scmp.eq.s32.totalorder %s19, 1
      %p94 = por %p92, %p93
      %p96 = scmp.ne.s32.totalorder %s79, %s95
      %p97 = scmp.eq.s32.totalorder %s19, 0
      %p98 = por %p96, %p97
      %s100 = sadd.s32 %s99, 1
      %p103 = scmp.eq.s32.totalorder %s13, 1
      %p104 = scmp.ne.s32.totalorder %s99, %s101
      %p105 = scmp.eq.s32.totalorder %s13, 0
      %p106 = por %p104, %p105
      %p107 = scmp.ne.s32.totalorder %s99, %s101
      %p108 = scmp.eq.s32.totalorder %s18, 1
      %p109 = por %p107, %p108
      %p110 = scmp.ne.s32.totalorder %s101, %s102
      %p111 = scmp.eq.s32.totalorder %s18, 0
      %p112 = por %p110, %p111
      %p113 = scmp.ne.s32.totalorder %s101, %s102
      %p114 = scmp.eq.s32.totalorder %s19, 1
      %p115 = por %p113, %p114
      %p117 = scmp.ne.s32.totalorder %s102, %s116
      %p118 = scmp.eq.s32.totalorder %s19, 0
      %p119 = por %p117, %p118
      %s120 = ssub.s32 %s13, %s20
      %p121 = scmp.eq.s32.totalorder %s120, 0
      %s123 = sadd.s32 %s122, 1
      %s124 = scalar_select %p121, %s122, %s123
      %p127 = pneg %p121
      %p128 = scmp.eq.s32.totalorder %s13, 1
      %p129 = por %p127, %p128
      %p130 = scmp.ne.s32.totalorder %s122, %s125
      %p131 = scmp.eq.s32.totalorder %s13, 0
      %p132 = por %p130, %p131
      %p133 = scmp.ne.s32.totalorder %s122, %s125
      %p134 = scmp.eq.s32.totalorder %s18, 1
      %p135 = por %p133, %p134
      %p136 = scmp.ne.s32.totalorder %s125, %s126
      %p137 = scmp.eq.s32.totalorder %s18, 0
      %p138 = por %p136, %p137
      %p139 = scmp.ne.s32.totalorder %s125, %s126
      %p140 = scmp.eq.s32.totalorder %s19, 1
      %p141 = por %p139, %p140
      %p143 = scmp.ne.s32.totalorder %s126, %s142
      %p144 = scmp.eq.s32.totalorder %s19, 0
      %p145 = por %p143, %p144
      %p146 = scmp.le.s32.totalorder 1, %s13
      %p147 = scmp.lt.s32.totalorder %s13, 3
      %p148 = pnand %p146, %p147
      %p149 = pneg %p148
      // Predicated region
      $region9: #{relate_module_batched.1} parent=5 // pred_check
        _
      $region10: #{relate_module_batched.1} parent=5 // pred_check_branch
        %151 = sbr.rel (%p148) target = $region12
      $region11: #{relate_module_batched.1} parent=5 // pred_region
        %s152 = ssub.s32 %s13, 1
        // Predicated region
        $region13: #{relate_module_batched.1} parent=11 // pred_check
          %p153 = pneg %p112
        $region14: #{relate_module_batched.1} parent=11 // pred_check_branch
          %155 = sbr.rel (%p153) target = $region16
        $region15: #{relate_module_batched.1} parent=11 // pred_region
          _
        $region16: #{relate_module_batched.1} parent=11 // pred_fallthru
          _
      $region12: #{relate_module_batched.1} parent=5 // pred_fallthru
        _
      %p156 = scmp.lt.s32.totalorder %s13, 2
      // Predicated region
      $region17: #{relate_module_batched.1} parent=5 // pred_check
        %p157 = pneg %p156
      $region18: #{relate_module_batched.1} parent=5 // pred_check_branch
        %159 = sbr.rel (%p157) target = $region20
      $region19: #{relate_module_batched.1} parent=5 // pred_region
        // Predicated region
        $region21: #{relate_module_batched.1} parent=19 // pred_check
          %p160 = pneg %p33
        $region22: #{relate_module_batched.1} parent=19 // pred_check_branch
          %162 = sbr.rel (%p160) target = $region24
        $region23: #{relate_module_batched.1} parent=19 // pred_region
          %s163 = sand.u32 %s23, 1
          %s164 = sand.u32 %s23, 1
          %s165 = smul.addr %s164, 16
          %s166 = scalar_lea.vmem [#allocation2], %s165
          %s167 = smul.addr %s13, 8
          %s168 = scalar_lea.vmem %s0, %s167
          // Predicated region
          $region25: #{relate_module_batched.1} parent=23 // pred_check
            _
          $region26: #{relate_module_batched.1} parent=23 // pred_check_branch
            %170 = sbr.rel (0) target = $region28
          $region27: #{relate_module_batched.1} parent=23 // pred_region
            // Predicated region
            $region29: #{relate_module_batched.1} parent=27 // pred_check
              _
            $region30: #{relate_module_batched.1} parent=27 // pred_check_branch
              %172 = sbr.rel (0) target = $region32
            $region31: #{relate_module_batched.1} parent=27 // pred_region
              // Predicated region
              $region44: #{relate_module_batched.1} parent=31 // pred_check
                _
              $region45: #{relate_module_batched.1} parent=31 // pred_check_branch
                %190 = sbr.rel (0) target = $region47
              $region46: #{relate_module_batched.1} parent=31 // pred_region
                loop: start=0, step=1, limit=1
                $region48: #{relate_module_batched.1} parent=46 // loop_pre_header
                  _
                $region49: #{relate_module_batched.1} parent=46 // loop_header
                  %s192 = sphi 0, %s196
                  %p193 = scmp.ge.s32.totalorder %s192, 1
                  %s197 = sphi %s168, %s168
                  %s198 = sphi %s166, %s166
                $region50: #{relate_module_batched.1} parent=46 // loop_header_branch
                  %195 = sbr.rel (%p193) target = $region54
                $region51: #{relate_module_batched.1} parent=46 // loop_body
                  %v199 = vld [vmem:[%s197] sm:$0xff]
                  %200 = vst [vmem:[%s198] sm:$0xff] %v199
                  %v201 = vld [vmem:[%s197 + $0x10] sm:$0xff]
                  %202 = vst [vmem:[%s198 + $0x8] sm:$0xff] %v201
                $region52: #{relate_module_batched.1} parent=46 // loop_footer
                  %s196 = sadd.s32 1, %s192
                $region53: #{relate_module_batched.1} parent=46 // loop_footer_branch
                  %191 = sbr.rel target = $region49
                $region54: #{relate_module_batched.1} parent=46 // loop_exit
                  _
              $region47: #{relate_module_batched.1} parent=31 // pred_fallthru
                _
              // Predicated region
              $region55: #{relate_module_batched.1} parent=31 // pred_check
                _
              $region56: #{relate_module_batched.1} parent=31 // pred_check_branch
                %204 = sbr.rel target = $region58
              $region57: #{relate_module_batched.1} parent=31 // pred_region
                _
              $region58: #{relate_module_batched.1} parent=31 // pred_fallthru
                _
            $region32: #{relate_module_batched.1} parent=27 // pred_fallthru
              _
            // Predicated region
            $region33: #{relate_module_batched.1} parent=27 // pred_check
              _
            $region34: #{relate_module_batched.1} parent=27 // pred_check_branch
              %174 = sbr.rel target = $region36
            $region35: #{relate_module_batched.1} parent=27 // pred_region
              %s176 = ssub.s32 256, 1
              loop: start=0, step=1, limit=1
              $region37: #{relate_module_batched.1} parent=35 // loop_pre_header
                _
              $region38: #{relate_module_batched.1} parent=35 // loop_header
                %s178 = sphi 0, %s182
                %p179 = scmp.ge.s32.totalorder %s178, 1
                %s183 = sphi %s168, %s168
                %s184 = sphi %s166, %s166
              $region39: #{relate_module_batched.1} parent=35 // loop_header_branch
                %181 = sbr.rel (%p179) target = $region43
              $region40: #{relate_module_batched.1} parent=35 // loop_body
                %v185 = vld [vmem:[%s183] sm:%s176]
                %186 = vst [vmem:[%s184] sm:%s176] %v185
                %v187 = vld [vmem:[%s183 + $0x10] sm:%s176]
                %188 = vst [vmem:[%s184 + $0x8] sm:%s176] %v187
              $region41: #{relate_module_batched.1} parent=35 // loop_footer
                %s182 = sadd.s32 1, %s178
              $region42: #{relate_module_batched.1} parent=35 // loop_footer_branch
                %177 = sbr.rel target = $region38
              $region43: #{relate_module_batched.1} parent=35 // loop_exit
                _
            $region36: #{relate_module_batched.1} parent=27 // pred_fallthru
              _
          $region28: #{relate_module_batched.1} parent=23 // pred_fallthru
            _
          %205 = vnop
        $region24: #{relate_module_batched.1} parent=19 // pred_fallthru
          _
        // Predicated region
        $region59: #{relate_module_batched.1} parent=19 // pred_check
          %p206 = pneg %p59
        $region60: #{relate_module_batched.1} parent=19 // pred_check_branch
          %208 = sbr.rel (%p206) target = $region62
        $region61: #{relate_module_batched.1} parent=19 // pred_region
          %s209 = sand.u32 %s49, 1
          %s210 = sand.u32 %s49, 1
          %s211 = smul.addr %s210, 64
          %s212 = scalar_lea.vmem [#allocation3], %s211
          %s213 = smul.addr %s13, 2
          %s214 = scalar_lea.vmem %s1, %s213
          // Predicated region
          $region63: #{relate_module_batched.1} parent=61 // pred_check
            _
          $region64: #{relate_module_batched.1} parent=61 // pred_check_branch
            %216 = sbr.rel (0) target = $region66
          $region65: #{relate_module_batched.1} parent=61 // pred_region
            // Predicated region
            $region67: #{relate_module_batched.1} parent=65 // pred_check
              _
            $region68: #{relate_module_batched.1} parent=65 // pred_check_branch
              %218 = sbr.rel target = $region70
            $region69: #{relate_module_batched.1} parent=65 // pred_region
              // Predicated region
              $region82: #{relate_module_batched.1} parent=69 // pred_check
                _
              $region83: #{relate_module_batched.1} parent=69 // pred_check_branch
                %296 = sbr.rel (0) target = $region85
              $region84: #{relate_module_batched.1} parent=69 // pred_region
                loop: start=0, step=1, limit=1
                $region86: #{relate_module_batched.1} parent=84 // loop_pre_header
                  _
                $region87: #{relate_module_batched.1} parent=84 // loop_header
                  %s298 = sphi 0, %s302
                  %p299 = scmp.ge.s32.totalorder %s298, 1
                  %s303 = sphi %s214, %s214
                  %s304 = sphi %s212, %s212
                $region88: #{relate_module_batched.1} parent=84 // loop_header_branch
                  %301 = sbr.rel (%p299) target = $region92
                $region89: #{relate_module_batched.1} parent=84 // loop_body
                  _
                $region90: #{relate_module_batched.1} parent=84 // loop_footer
                  %s302 = sadd.s32 1, %s298
                $region91: #{relate_module_batched.1} parent=84 // loop_footer_branch
                  %297 = sbr.rel target = $region87
                $region92: #{relate_module_batched.1} parent=84 // loop_exit
                  _
                %s306 = ssub.s32 4, 1
                loop: start=0, step=1, limit=1
                $region93: #{relate_module_batched.1} parent=84 // loop_pre_header
                  _
                $region94: #{relate_module_batched.1} parent=84 // loop_header
                  %s308 = sphi 0, %s312
                  %p309 = scmp.ge.s32.totalorder %s308, 1
                  %s313 = sphi %s214, %s214
                  %s314 = sphi %s212, %s212
                $region95: #{relate_module_batched.1} parent=84 // loop_header_branch
                  %311 = sbr.rel (%p309) target = $region99
                $region96: #{relate_module_batched.1} parent=84 // loop_body
                  %v315 = vld [vmem:[%s313] sm:%s306]
                  %316 = vst [vmem:[%s314] sm:%s306] %v315
                  %v317 = vld [vmem:[%s313 + $0x4] sm:%s306]
                  %318 = vst [vmem:[%s314 + $0x2] sm:%s306] %v317
                  %v319 = vld [vmem:[%s313 + $0x8] sm:%s306]
                  %320 = vst [vmem:[%s314 + $0x4] sm:%s306] %v319
                  %v321 = vld [vmem:[%s313 + $0xc] sm:%s306]
                  %322 = vst [vmem:[%s314 + $0x6] sm:%s306] %v321
                  %v323 = vld [vmem:[%s313 + $0x10] sm:%s306]
                  %324 = vst [vmem:[%s314 + $0x8] sm:%s306] %v323
                  %v325 = vld [vmem:[%s313 + $0x14] sm:%s306]
                  %326 = vst [vmem:[%s314 + $0xa] sm:%s306] %v325
                  %v327 = vld [vmem:[%s313 + $0x18] sm:%s306]
                  %328 = vst [vmem:[%s314 + $0xc] sm:%s306] %v327
                  %v329 = vld [vmem:[%s313 + $0x1c] sm:%s306]
                  %330 = vst [vmem:[%s314 + $0xe] sm:%s306] %v329
                  %v331 = vld [vmem:[%s313 + $0x20] sm:%s306]
                  %332 = vst [vmem:[%s314 + $0x10] sm:%s306] %v331
                  %v333 = vld [vmem:[%s313 + $0x24] sm:%s306]
                  %334 = vst [vmem:[%s314 + $0x12] sm:%s306] %v333
                  %v335 = vld [vmem:[%s313 + $0x28] sm:%s306]
                  %336 = vst [vmem:[%s314 + $0x14] sm:%s306] %v335
                  %v337 = vld [vmem:[%s313 + $0x2c] sm:%s306]
                  %338 = vst [vmem:[%s314 + $0x16] sm:%s306] %v337
                  %v339 = vld [vmem:[%s313 + $0x30] sm:%s306]
                  %340 = vst [vmem:[%s314 + $0x18] sm:%s306] %v339
                  %v341 = vld [vmem:[%s313 + $0x34] sm:%s306]
                  %342 = vst [vmem:[%s314 + $0x1a] sm:%s306] %v341
                  %v343 = vld [vmem:[%s313 + $0x38] sm:%s306]
                  %344 = vst [vmem:[%s314 + $0x1c] sm:%s306] %v343
                  %v345 = vld [vmem:[%s313 + $0x3c] sm:%s306]
                  %346 = vst [vmem:[%s314 + $0x1e] sm:%s306] %v345
                  %v347 = vld [vmem:[%s313 + $0x40] sm:%s306]
                  %348 = vst [vmem:[%s314 + $0x20] sm:%s306] %v347
                  %v349 = vld [vmem:[%s313 + $0x44] sm:%s306]
                  %350 = vst [vmem:[%s314 + $0x22] sm:%s306] %v349
                  %v351 = vld [vmem:[%s313 + $0x48] sm:%s306]
                  %352 = vst [vmem:[%s314 + $0x24] sm:%s306] %v351
                  %v353 = vld [vmem:[%s313 + $0x4c] sm:%s306]
                  %354 = vst [vmem:[%s314 + $0x26] sm:%s306] %v353
                  %v355 = vld [vmem:[%s313 + $0x50] sm:%s306]
                  %356 = vst [vmem:[%s314 + $0x28] sm:%s306] %v355
                  %v357 = vld [vmem:[%s313 + $0x54] sm:%s306]
                  %358 = vst [vmem:[%s314 + $0x2a] sm:%s306] %v357
                  %v359 = vld [vmem:[%s313 + $0x58] sm:%s306]
                  %360 = vst [vmem:[%s314 + $0x2c] sm:%s306] %v359
                  %v361 = vld [vmem:[%s313 + $0x5c] sm:%s306]
                  %362 = vst [vmem:[%s314 + $0x2e] sm:%s306] %v361
                  %v363 = vld [vmem:[%s313 + $0x60] sm:%s306]
                  %364 = vst [vmem:[%s314 + $0x30] sm:%s306] %v363
                  %v365 = vld [vmem:[%s313 + $0x64] sm:%s306]
                  %366 = vst [vmem:[%s314 + $0x32] sm:%s306] %v365
                  %v367 = vld [vmem:[%s313 + $0x68] sm:%s306]
                  %368 = vst [vmem:[%s314 + $0x34] sm:%s306] %v367
                  %v369 = vld [vmem:[%s313 + $0x6c] sm:%s306]
                  %370 = vst [vmem:[%s314 + $0x36] sm:%s306] %v369
                  %v371 = vld [vmem:[%s313 + $0x70] sm:%s306]
                  %372 = vst [vmem:[%s314 + $0x38] sm:%s306] %v371
                  %v373 = vld [vmem:[%s313 + $0x74] sm:%s306]
                  %374 = vst [vmem:[%s314 + $0x3a] sm:%s306] %v373
                  %v375 = vld [vmem:[%s313 + $0x78] sm:%s306]
                  %376 = vst [vmem:[%s314 + $0x3c] sm:%s306] %v375
                  %v377 = vld [vmem:[%s313 + $0x7c] sm:%s306]
                  %378 = vst [vmem:[%s314 + $0x3e] sm:%s306] %v377
                $region97: #{relate_module_batched.1} parent=84 // loop_footer
                  %s312 = sadd.s32 1, %s308
                $region98: #{relate_module_batched.1} parent=84 // loop_footer_branch
                  %307 = sbr.rel target = $region94
                $region99: #{relate_module_batched.1} parent=84 // loop_exit
                  _
              $region85: #{relate_module_batched.1} parent=69 // pred_fallthru
                _
            $region70: #{relate_module_batched.1} parent=65 // pred_fallthru
              _
            // Predicated region
            $region71: #{relate_module_batched.1} parent=65 // pred_check
              _
            $region72: #{relate_module_batched.1} parent=65 // pred_check_branch
              %220 = sbr.rel (0) target = $region74
            $region73: #{relate_module_batched.1} parent=65 // pred_region
              %s222 = ssub.s32 4, 1
              loop: start=0, step=1, limit=1
              $region75: #{relate_module_batched.1} parent=73 // loop_pre_header
                _
              $region76: #{relate_module_batched.1} parent=73 // loop_header
                %s224 = sphi 0, %s228
                %p225 = scmp.ge.s32.totalorder %s224, 1
                %s229 = sphi %s214, %s214
                %s230 = sphi %s212, %s212
              $region77: #{relate_module_batched.1} parent=73 // loop_header_branch
                %227 = sbr.rel (%p225) target = $region81
              $region78: #{relate_module_batched.1} parent=73 // loop_body
                %v231 = vld [vmem:[%s229] sm:%s222]
                %232 = vst [vmem:[%s230] sm:%s222] %v231
                %v233 = vld [vmem:[%s229 + $0x4] sm:%s222]
                %234 = vst [vmem:[%s230 + $0x2] sm:%s222] %v233
                %v235 = vld [vmem:[%s229 + $0x8] sm:%s222]
                %236 = vst [vmem:[%s230 + $0x4] sm:%s222] %v235
                %v237 = vld [vmem:[%s229 + $0xc] sm:%s222]
                %238 = vst [vmem:[%s230 + $0x6] sm:%s222] %v237
                %v239 = vld [vmem:[%s229 + $0x10] sm:%s222]
                %240 = vst [vmem:[%s230 + $0x8] sm:%s222] %v239
                %v241 = vld [vmem:[%s229 + $0x14] sm:%s222]
                %242 = vst [vmem:[%s230 + $0xa] sm:%s222] %v241
                %v243 = vld [vmem:[%s229 + $0x18] sm:%s222]
                %244 = vst [vmem:[%s230 + $0xc] sm:%s222] %v243
                %v245 = vld [vmem:[%s229 + $0x1c] sm:%s222]
                %246 = vst [vmem:[%s230 + $0xe] sm:%s222] %v245
                %v247 = vld [vmem:[%s229 + $0x20] sm:%s222]
                %248 = vst [vmem:[%s230 + $0x10] sm:%s222] %v247
                %v249 = vld [vmem:[%s229 + $0x24] sm:%s222]
                %250 = vst [vmem:[%s230 + $0x12] sm:%s222] %v249
                %v251 = vld [vmem:[%s229 + $0x28] sm:%s222]
                %252 = vst [vmem:[%s230 + $0x14] sm:%s222] %v251
                %v253 = vld [vmem:[%s229 + $0x2c] sm:%s222]
                %254 = vst [vmem:[%s230 + $0x16] sm:%s222] %v253
                %v255 = vld [vmem:[%s229 + $0x30] sm:%s222]
                %256 = vst [vmem:[%s230 + $0x18] sm:%s222] %v255
                %v257 = vld [vmem:[%s229 + $0x34] sm:%s222]
                %258 = vst [vmem:[%s230 + $0x1a] sm:%s222] %v257
                %v259 = vld [vmem:[%s229 + $0x38] sm:%s222]
                %260 = vst [vmem:[%s230 + $0x1c] sm:%s222] %v259
                %v261 = vld [vmem:[%s229 + $0x3c] sm:%s222]
                %262 = vst [vmem:[%s230 + $0x1e] sm:%s222] %v261
                %v263 = vld [vmem:[%s229 + $0x40] sm:%s222]
                %264 = vst [vmem:[%s230 + $0x20] sm:%s222] %v263
                %v265 = vld [vmem:[%s229 + $0x44] sm:%s222]
                %266 = vst [vmem:[%s230 + $0x22] sm:%s222] %v265
                %v267 = vld [vmem:[%s229 + $0x48] sm:%s222]
                %268 = vst [vmem:[%s230 + $0x24] sm:%s222] %v267
                %v269 = vld [vmem:[%s229 + $0x4c] sm:%s222]
                %270 = vst [vmem:[%s230 + $0x26] sm:%s222] %v269
                %v271 = vld [vmem:[%s229 + $0x50] sm:%s222]
                %272 = vst [vmem:[%s230 + $0x28] sm:%s222] %v271
                %v273 = vld [vmem:[%s229 + $0x54] sm:%s222]
                %274 = vst [vmem:[%s230 + $0x2a] sm:%s222] %v273
                %v275 = vld [vmem:[%s229 + $0x58] sm:%s222]
                %276 = vst [vmem:[%s230 + $0x2c] sm:%s222] %v275
                %v277 = vld [vmem:[%s229 + $0x5c] sm:%s222]
                %278 = vst [vmem:[%s230 + $0x2e] sm:%s222] %v277
                %v279 = vld [vmem:[%s229 + $0x60] sm:%s222]
                %280 = vst [vmem:[%s230 + $0x30] sm:%s222] %v279
                %v281 = vld [vmem:[%s229 + $0x64] sm:%s222]
                %282 = vst [vmem:[%s230 + $0x32] sm:%s222] %v281
                %v283 = vld [vmem:[%s229 + $0x68] sm:%s222]
                %284 = vst [vmem:[%s230 + $0x34] sm:%s222] %v283
                %v285 = vld [vmem:[%s229 + $0x6c] sm:%s222]
                %286 = vst [vmem:[%s230 + $0x36] sm:%s222] %v285
                %v287 = vld [vmem:[%s229 + $0x70] sm:%s222]
                %288 = vst [vmem:[%s230 + $0x38] sm:%s222] %v287
                %v289 = vld [vmem:[%s229 + $0x74] sm:%s222]
                %290 = vst [vmem:[%s230 + $0x3a] sm:%s222] %v289
                %v291 = vld [vmem:[%s229 + $0x78] sm:%s222]
                %292 = vst [vmem:[%s230 + $0x3c] sm:%s222] %v291
                %v293 = vld [vmem:[%s229 + $0x7c] sm:%s222]
                %294 = vst [vmem:[%s230 + $0x3e] sm:%s222] %v293
              $region79: #{relate_module_batched.1} parent=73 // loop_footer
                %s228 = sadd.s32 1, %s224
              $region80: #{relate_module_batched.1} parent=73 // loop_footer_branch
                %223 = sbr.rel target = $region76
              $region81: #{relate_module_batched.1} parent=73 // loop_exit
                _
            $region74: #{relate_module_batched.1} parent=65 // pred_fallthru
              _
          $region66: #{relate_module_batched.1} parent=61 // pred_fallthru
            _
          %379 = vnop
        $region62: #{relate_module_batched.1} parent=19 // pred_fallthru
          _
        // Predicated region
        $region100: #{relate_module_batched.1} parent=19 // pred_check
          %p380 = pneg %p85
        $region101: #{relate_module_batched.1} parent=19 // pred_check_branch
          %382 = sbr.rel (%p380) target = $region103
        $region102: #{relate_module_batched.1} parent=19 // pred_region
          %s383 = sand.u32 %s75, 1
          %s384 = sand.u32 %s75, 1
          %s385 = smul.addr %s384, 32
          %s386 = scalar_lea.vmem [#allocation4], %s385
          %s387 = smul.addr %s13, 8
          %s388 = scalar_lea.vmem %s2, %s387
          // Predicated region
          $region104: #{relate_module_batched.1} parent=102 // pred_check
            _
          $region105: #{relate_module_batched.1} parent=102 // pred_check_branch
            %390 = sbr.rel (0) target = $region107
          $region106: #{relate_module_batched.1} parent=102 // pred_region
            // Predicated region
            $region108: #{relate_module_batched.1} parent=106 // pred_check
              _
            $region109: #{relate_module_batched.1} parent=106 // pred_check_branch
              %392 = sbr.rel (0) target = $region111
            $region110: #{relate_module_batched.1} parent=106 // pred_region
              // Predicated region
              $region123: #{relate_module_batched.1} parent=110 // pred_check
                _
              $region124: #{relate_module_batched.1} parent=110 // pred_check_branch
                %414 = sbr.rel (0) target = $region126
              $region125: #{relate_module_batched.1} parent=110 // pred_region
                loop: start=0, step=1, limit=1
                $region127: #{relate_module_batched.1} parent=125 // loop_pre_header
                  _
                $region128: #{relate_module_batched.1} parent=125 // loop_header
                  %s416 = sphi 0, %s420
                  %p417 = scmp.ge.s32.totalorder %s416, 1
                  %s421 = sphi %s388, %s388
                  %s422 = sphi %s386, %s386
                $region129: #{relate_module_batched.1} parent=125 // loop_header_branch
                  %419 = sbr.rel (%p417) target = $region133
                $region130: #{relate_module_batched.1} parent=125 // loop_body
                  %v423 = vld [vmem:[%s421] sm:$0xff]
                  %424 = vst [vmem:[%s422] sm:$0xff] %v423
                  %v425 = vld [vmem:[%s421 + $0x10] sm:$0xff]
                  %426 = vst [vmem:[%s422 + $0x8] sm:$0xff] %v425
                  %v427 = vld [vmem:[%s421 + $0x20] sm:$0xff]
                  %428 = vst [vmem:[%s422 + $0x10] sm:$0xff] %v427
                  %v429 = vld [vmem:[%s421 + $0x30] sm:$0xff]
                  %430 = vst [vmem:[%s422 + $0x18] sm:$0xff] %v429
                $region131: #{relate_module_batched.1} parent=125 // loop_footer
                  %s420 = sadd.s32 1, %s416
                $region132: #{relate_module_batched.1} parent=125 // loop_footer_branch
                  %415 = sbr.rel target = $region128
                $region133: #{relate_module_batched.1} parent=125 // loop_exit
                  _
              $region126: #{relate_module_batched.1} parent=110 // pred_fallthru
                _
              // Predicated region
              $region134: #{relate_module_batched.1} parent=110 // pred_check
                _
              $region135: #{relate_module_batched.1} parent=110 // pred_check_branch
                %432 = sbr.rel target = $region137
              $region136: #{relate_module_batched.1} parent=110 // pred_region
                _
              $region137: #{relate_module_batched.1} parent=110 // pred_fallthru
                _
            $region111: #{relate_module_batched.1} parent=106 // pred_fallthru
              _
            // Predicated region
            $region112: #{relate_module_batched.1} parent=106 // pred_check
              _
            $region113: #{relate_module_batched.1} parent=106 // pred_check_branch
              %394 = sbr.rel target = $region115
            $region114: #{relate_module_batched.1} parent=106 // pred_region
              %s396 = ssub.s32 256, 1
              loop: start=0, step=1, limit=1
              $region116: #{relate_module_batched.1} parent=114 // loop_pre_header
                _
              $region117: #{relate_module_batched.1} parent=114 // loop_header
                %s398 = sphi 0, %s402
                %p399 = scmp.ge.s32.totalorder %s398, 1
                %s403 = sphi %s388, %s388
                %s404 = sphi %s386, %s386
              $region118: #{relate_module_batched.1} parent=114 // loop_header_branch
                %401 = sbr.rel (%p399) target = $region122
              $region119: #{relate_module_batched.1} parent=114 // loop_body
                %v405 = vld [vmem:[%s403] sm:%s396]
                %406 = vst [vmem:[%s404] sm:%s396] %v405
                %v407 = vld [vmem:[%s403 + $0x10] sm:%s396]
                %408 = vst [vmem:[%s404 + $0x8] sm:%s396] %v407
                %v409 = vld [vmem:[%s403 + $0x20] sm:%s396]
                %410 = vst [vmem:[%s404 + $0x10] sm:%s396] %v409
                %v411 = vld [vmem:[%s403 + $0x30] sm:%s396]
                %412 = vst [vmem:[%s404 + $0x18] sm:%s396] %v411
              $region120: #{relate_module_batched.1} parent=114 // loop_footer
                %s402 = sadd.s32 1, %s398
              $region121: #{relate_module_batched.1} parent=114 // loop_footer_branch
                %397 = sbr.rel target = $region117
              $region122: #{relate_module_batched.1} parent=114 // loop_exit
                _
            $region115: #{relate_module_batched.1} parent=106 // pred_fallthru
              _
          $region107: #{relate_module_batched.1} parent=102 // pred_fallthru
            _
          %433 = vnop
        $region103: #{relate_module_batched.1} parent=19 // pred_fallthru
          _
      $region20: #{relate_module_batched.1} parent=5 // pred_fallthru
        _
      %p434 = scmp.le.s32.totalorder 1, %s13
      %p435 = scmp.lt.s32.totalorder %s13, 3
      %p436 = pnand %p434, %p435
      %p437 = pneg %p436
      // Predicated region
      $region138: #{relate_module_batched.1} parent=5 // pred_check
        _
      $region139: #{relate_module_batched.1} parent=5 // pred_check_branch
        %439 = sbr.rel (%p436) target = $region141
      $region140: #{relate_module_batched.1} parent=5 // pred_region
        %s440 = ssub.s32 %s13, 1
        %s441 = sand.u32 %s26, 1
        %s442 = sand.u32 %s26, 1
        %s443 = smul.addr %s442, 16
        %s444 = scalar_lea.vmem [#allocation2], %s443
        // Predicated region
        $region142: #{relate_module_batched.1} parent=140 // pred_check
          %p445 = pneg %p39
        $region143: #{relate_module_batched.1} parent=140 // pred_check_branch
          %447 = sbr.rel (%p445) target = $region145
        $region144: #{relate_module_batched.1} parent=140 // pred_region
          _
        $region145: #{relate_module_batched.1} parent=140 // pred_fallthru
          _
        %s448 = sand.u32 %s52, 1
        %s449 = sand.u32 %s52, 1
        %s450 = smul.addr %s449, 64
        %s451 = scalar_lea.vmem [#allocation3], %s450
        // Predicated region
        $region146: #{relate_module_batched.1} parent=140 // pred_check
          %p452 = pneg %p65
        $region147: #{relate_module_batched.1} parent=140 // pred_check_branch
          %454 = sbr.rel (%p452) target = $region149
        $region148: #{relate_module_batched.1} parent=140 // pred_region
          _
        $region149: #{relate_module_batched.1} parent=140 // pred_fallthru
          _
        %s455 = sand.u32 %s78, 1
        %s456 = sand.u32 %s78, 1
        %s457 = smul.addr %s456, 32
        %s458 = scalar_lea.vmem [#allocation4], %s457
        // Predicated region
        $region150: #{relate_module_batched.1} parent=140 // pred_check
          %p459 = pneg %p91
        $region151: #{relate_module_batched.1} parent=140 // pred_check_branch
          %461 = sbr.rel (%p459) target = $region153
        $region152: #{relate_module_batched.1} parent=140 // pred_region
          _
        $region153: #{relate_module_batched.1} parent=140 // pred_fallthru
          _
        %s462 = sand.u32 %s26, 1
        %s463 = sand.u32 %s26, 1
        %s464 = smul.addr %s463, 16
        %s465 = scalar_lea.vmem [#allocation2], %s464
        %p466 = pneg %p39
        %p467 = pneg %p36
        %s468 = sand.u32 %s52, 1
        %s469 = sand.u32 %s52, 1
        %s470 = smul.addr %s469, 64
        %s471 = scalar_lea.vmem [#allocation3], %s470
        %p472 = pneg %p65
        %p473 = pneg %p62
        %s474 = sand.u32 %s78, 1
        %s475 = sand.u32 %s78, 1
        %s476 = smul.addr %s475, 32
        %s477 = scalar_lea.vmem [#allocation4], %s476
        %p478 = pneg %p91
        %p479 = pneg %p88
        %p480 = pneg %p112
        %p481 = pneg %p109
        %p482 = pneg %p138
        %p483 = pneg %p135
        %s484 = sand.u32 %s125, 1
        %s485 = scalar_lea.sflag [#allocation6], %s484
        %s486 = sand.u32 %s125, 1
        %s487 = smul.addr %s486, 16
        %s488 = scalar_lea.vmem [#allocation5], %s487
        %v489 = vld [vmem:[%s3] sm:$0xff]
        %v490 = vld [vmem:[%s458] sm:$0xff]
        %v491 = vld [vmem:[%s458 + $0x8] sm:$0xff]
        %v492 = vld [vmem:[%s458 + $0x10] sm:$0xff]
        %v493 = vld [vmem:[%s458 + $0x18] sm:$0xff]
        %vm494 = vcmask 261120
        %v496 = vsel %vm494, %v489, 0
        %498 = vmatpush.msra.mxu0 0.0
        %499 = vmatpush.msra.mxu0 0.0
        %500 = vmatpush.msra.mxu0 0.0
        %501 = vmatpush.msra.mxu0 0.0
        %502 = vmatpush.msra.mxu0 0.0
        %503 = vmatpush.msra.mxu0 0.0
        %504 = vmatpush.msra.mxu0 0.0
        %505 = vmatpush.msra.mxu0 0.0
        %506 = vmatpush.msra.mxu0 0.0
        %507 = vmatpush.msra.mxu0 0.0
        %508 = vmatpush.msra.mxu0 0.0
        %509 = vmatpush.msra.mxu0 0.0
        %510 = vmatpush.msra.mxu0 %v493
        %511 = vmatpush.msra.mxu0 %v492
        %512 = vmatpush.msra.mxu0 %v491
        %513 = vmatpush.msra.mxu0 %v490
        %514 = vmatmul.f32.gmra.mxu0 %v496
        %v515 = vpop.f32.mrf.mxu0
        %v516 = vadd.f32 0.0, %v515
        %517 = vdwg.mxu0
        %v518 = vrot.slane %v516, 4
        %v519 = vmax.f32 %v516, %v518
        %v520 = vrot.slane %v519, 2
        %v521 = vmax.f32 %v519, %v520
        %v522 = vrot.slane %v521, 1
        %v523 = vmax.f32 %v521, %v522
        %v524 = vsub.f32 %v516, %v523
        %v525 = vmul.f32 %v524, 1.442695
        %v526 = vpow.pop %v525
        %v527 = vrot.slane %v526, 4
        %v528 = vadd.f32 %v526, %v527
        %v529 = vrot.slane %v528, 2
        %v530 = vadd.f32 %v528, %v529
        %v531 = vrot.slane %v530, 1
        %v532 = vadd.f32 %v530, %v531
        %v533 = vrcp.pop %v532
        %v534 = vmul.f32 %v532, %v533
        %v535 = vsub.f32 2.0, %v534
        %v536 = vmul.f32 %v533, %v535
        %v537 = vmul.f32 %v526, %v536
        %v538 = vperm.slane %v537, 0
        %v539 = vperm.slane %v537, 1
        %v540 = vperm.slane %v537, 2
        %v541 = vperm.slane %v537, 3
        %v542 = vperm.slane %v537, 4
        %v543 = vperm.slane %v537, 5
        %v544 = vperm.slane %v537, 6
        %v545 = vperm.slane %v537, 7
        %v546 = vld [vmem:[%s444] sm:$0xff]
        %v547 = vld [vmem:[%s444 + $0x8] sm:$0xff]
        %v548 = vld [vmem:[%s451] sm:$0x3]
        %v549 = vld [vmem:[%s451 + $0x2] sm:$0x3]
        %v550 = vunpack.c.0.s8 %v548
        %v551 = vunpack.c.0.s8 %v549
        %v552 = vand.u32 %v550, 1
        %v553 = vand.u32 %v551, 1
        %vm554 = vcmp.ne.s32.totalorder %v552, 0
        %vm555 = vcmp.ne.s32.totalorder %v553, 0
        %v556 = vsel %vm554, %v539, %v538
        %v557 = vsel %vm555, %v539, %v538
        %v558 = vsel %vm554, %v541, %v540
        %v559 = vsel %vm555, %v541, %v540
        %v560 = vsel %vm554, %v543, %v542
        %v561 = vsel %vm555, %v543, %v542
        %v562 = vsel %vm554, %v545, %v544
        %v563 = vsel %vm555, %v545, %v544
        %v564 = vand.u32 %v550, 2
        %v565 = vand.u32 %v551, 2
        %vm566 = vcmp.ne.s32.totalorder %v564, 0
        %vm567 = vcmp.ne.s32.totalorder %v565, 0
        %v568 = vsel %vm566, %v558, %v556
        %v569 = vsel %vm567, %v559, %v557
        %v570 = vsel %vm566, %v562, %v560
        %v571 = vsel %vm567, %v563, %v561
        %v572 = vand.u32 %v550, 4
        %v573 = vand.u32 %v551, 4
        %vm574 = vcmp.ne.s32.totalorder %v572, 0
        %vm575 = vcmp.ne.s32.totalorder %v573, 0
        %v576 = vsel %vm574, %v570, %v568
        %v577 = vsel %vm575, %v571, %v569
        %v578 = vperm.slane %v546, 0
        %v579 = vmul.f32 %v578, %v576
        %v580 = vmul.f32 %v578, %v577
        %v581 = vadd.f32 %v579, 0.0
        %v582 = vadd.f32 %v580, 0.0
        %s583 = sadd.s32 0, 2
        %s584 = smul.addr %s583, 2
        %s585 = scalar_lea.vmem %s451, %s584 [#allocation3]
        %v586 = vld [vmem:[%s585] sm:$0x3]
        %v587 = vld [vmem:[%s585 + $0x2] sm:$0x3]
        %v588 = vunpack.c.0.s8 %v586
        %v589 = vunpack.c.0.s8 %v587
        %v590 = vand.u32 %v588, 1
        %v591 = vand.u32 %v589, 1
        %vm592 = vcmp.ne.s32.totalorder %v590, 0
        %vm593 = vcmp.ne.s32.totalorder %v591, 0
        %v594 = vsel %vm592, %v539, %v538
        %v595 = vsel %vm593, %v539, %v538
        %v596 = vsel %vm592, %v541, %v540
        %v597 = vsel %vm593, %v541, %v540
        %v598 = vsel %vm592, %v543, %v542
        %v599 = vsel %vm593, %v543, %v542
        %v600 = vsel %vm592, %v545, %v544
        %v601 = vsel %vm593, %v545, %v544
        %v602 = vand.u32 %v588, 2
        %v603 = vand.u32 %v589, 2
        %vm604 = vcmp.ne.s32.totalorder %v602, 0
        %vm605 = vcmp.ne.s32.totalorder %v603, 0
        %v606 = vsel %vm604, %v596, %v594
        %v607 = vsel %vm605, %v597, %v595
        %v608 = vsel %vm604, %v600, %v598
        %v609 = vsel %vm605, %v601, %v599
        %v610 = vand.u32 %v588, 4
        %v611 = vand.u32 %v589, 4
        %vm612 = vcmp.ne.s32.totalorder %v610, 0
        %vm613 = vcmp.ne.s32.totalorder %v611, 0
        %v614 = vsel %vm612, %v608, %v606
        %v615 = vsel %vm613, %v609, %v607
        %v616 = vperm.slane %v546, 1
        %v617 = vmul.f32 %v616, %v614
        %v618 = vmul.f32 %v616, %v615
        %v619 = vadd.f32 %v581, %v617
        %v620 = vadd.f32 %v582, %v618
        %s621 = sadd.s32 0, 4
        %s622 = smul.addr %s621, 2
        %s623 = scalar_lea.vmem %s451, %s622 [#allocation3]
        %v624 = vld [vmem:[%s623] sm:$0x3]
        %v625 = vld [vmem:[%s623 + $0x2] sm:$0x3]
        %v626 = vunpack.c.0.s8 %v624
        %v627 = vunpack.c.0.s8 %v625
        %v628 = vand.u32 %v626, 1
        %v629 = vand.u32 %v627, 1
        %vm630 = vcmp.ne.s32.totalorder %v628, 0
        %vm631 = vcmp.ne.s32.totalorder %v629, 0
        %v632 = vsel %vm630, %v539, %v538
        %v633 = vsel %vm631, %v539, %v538
        %v634 = vsel %vm630, %v541, %v540
        %v635 = vsel %vm631, %v541, %v540
        %v636 = vsel %vm630, %v543, %v542
        %v637 = vsel %vm631, %v543, %v542
        %v638 = vsel %vm630, %v545, %v544
        %v639 = vsel %vm631, %v545, %v544
        %v640 = vand.u32 %v626, 2
        %v641 = vand.u32 %v627, 2
        %vm642 = vcmp.ne.s32.totalorder %v640, 0
        %vm643 = vcmp.ne.s32.totalorder %v641, 0
        %v644 = vsel %vm642, %v634, %v632
        %v645 = vsel %vm643, %v635, %v633
        %v646 = vsel %vm642, %v638, %v636
        %v647 = vsel %vm643, %v639, %v637
        %v648 = vand.u32 %v626, 4
        %v649 = vand.u32 %v627, 4
        %vm650 = vcmp.ne.s32.totalorder %v648, 0
        %vm651 = vcmp.ne.s32.totalorder %v649, 0
        %v652 = vsel %vm650, %v646, %v644
        %v653 = vsel %vm651, %v647, %v645
        %v654 = vperm.slane %v546, 2
        %v655 = vmul.f32 %v654, %v652
        %v656 = vmul.f32 %v654, %v653
        %v657 = vadd.f32 %v619, %v655
        %v658 = vadd.f32 %v620, %v656
        %s659 = sadd.s32 0, 6
        %s660 = smul.addr %s659, 2
        %s661 = scalar_lea.vmem %s451, %s660 [#allocation3]
        %v662 = vld [vmem:[%s661] sm:$0x3]
        %v663 = vld [vmem:[%s661 + $0x2] sm:$0x3]
        %v664 = vunpack.c.0.s8 %v662
        %v665 = vunpack.c.0.s8 %v663
        %v666 = vand.u32 %v664, 1
        %v667 = vand.u32 %v665, 1
        %vm668 = vcmp.ne.s32.totalorder %v666, 0
        %vm669 = vcmp.ne.s32.totalorder %v667, 0
        %v670 = vsel %vm668, %v539, %v538
        %v671 = vsel %vm669, %v539, %v538
        %v672 = vsel %vm668, %v541, %v540
        %v673 = vsel %vm669, %v541, %v540
        %v674 = vsel %vm668, %v543, %v542
        %v675 = vsel %vm669, %v543, %v542
        %v676 = vsel %vm668, %v545, %v544
        %v677 = vsel %vm669, %v545, %v544
        %v678 = vand.u32 %v664, 2
        %v679 = vand.u32 %v665, 2
        %vm680 = vcmp.ne.s32.totalorder %v678, 0
        %vm681 = vcmp.ne.s32.totalorder %v679, 0
        %v682 = vsel %vm680, %v672, %v670
        %v683 = vsel %vm681, %v673, %v671
        %v684 = vsel %vm680, %v676, %v674
        %v685 = vsel %vm681, %v677, %v675
        %v686 = vand.u32 %v664, 4
        %v687 = vand.u32 %v665, 4
        %vm688 = vcmp.ne.s32.totalorder %v686, 0
        %vm689 = vcmp.ne.s32.totalorder %v687, 0
        %v690 = vsel %vm688, %v684, %v682
        %v691 = vsel %vm689, %v685, %v683
        %v692 = vperm.slane %v546, 3
        %v693 = vmul.f32 %v692, %v690
        %v694 = vmul.f32 %v692, %v691
        %v695 = vadd.f32 %v657, %v693
        %v696 = vadd.f32 %v658, %v694
        %s697 = sadd.s32 0, 8
        %s698 = smul.addr %s697, 2
        %s699 = scalar_lea.vmem %s451, %s698 [#allocation3]
        %v700 = vld [vmem:[%s699] sm:$0x3]
        %v701 = vld [vmem:[%s699 + $0x2] sm:$0x3]
        %v702 = vunpack.c.0.s8 %v700
        %v703 = vunpack.c.0.s8 %v701
        %v704 = vand.u32 %v702, 1
        %v705 = vand.u32 %v703, 1
        %vm706 = vcmp.ne.s32.totalorder %v704, 0
        %vm707 = vcmp.ne.s32.totalorder %v705, 0
        %v708 = vsel %vm706, %v539, %v538
        %v709 = vsel %vm707, %v539, %v538
        %v710 = vsel %vm706, %v541, %v540
        %v711 = vsel %vm707, %v541, %v540
        %v712 = vsel %vm706, %v543, %v542
        %v713 = vsel %vm707, %v543, %v542
        %v714 = vsel %vm706, %v545, %v544
        %v715 = vsel %vm707, %v545, %v544
        %v716 = vand.u32 %v702, 2
        %v717 = vand.u32 %v703, 2
        %vm718 = vcmp.ne.s32.totalorder %v716, 0
        %vm719 = vcmp.ne.s32.totalorder %v717, 0
        %v720 = vsel %vm718, %v710, %v708
        %v721 = vsel %vm719, %v711, %v709
        %v722 = vsel %vm718, %v714, %v712
        %v723 = vsel %vm719, %v715, %v713
        %v724 = vand.u32 %v702, 4
        %v725 = vand.u32 %v703, 4
        %vm726 = vcmp.ne.s32.totalorder %v724, 0
        %vm727 = vcmp.ne.s32.totalorder %v725, 0
        %v728 = vsel %vm726, %v722, %v720
        %v729 = vsel %vm727, %v723, %v721
        %v730 = vperm.slane %v546, 4
        %v731 = vmul.f32 %v730, %v728
        %v732 = vmul.f32 %v730, %v729
        %v733 = vadd.f32 %v695, %v731
        %v734 = vadd.f32 %v696, %v732
        %s735 = sadd.s32 0, 10
        %s736 = smul.addr %s735, 2
        %s737 = scalar_lea.vmem %s451, %s736 [#allocation3]
        %v738 = vld [vmem:[%s737] sm:$0x3]
        %v739 = vld [vmem:[%s737 + $0x2] sm:$0x3]
        %v740 = vunpack.c.0.s8 %v738
        %v741 = vunpack.c.0.s8 %v739
        %v742 = vand.u32 %v740, 1
        %v743 = vand.u32 %v741, 1
        %vm744 = vcmp.ne.s32.totalorder %v742, 0
        %vm745 = vcmp.ne.s32.totalorder %v743, 0
        %v746 = vsel %vm744, %v539, %v538
        %v747 = vsel %vm745, %v539, %v538
        %v748 = vsel %vm744, %v541, %v540
        %v749 = vsel %vm745, %v541, %v540
        %v750 = vsel %vm744, %v543, %v542
        %v751 = vsel %vm745, %v543, %v542
        %v752 = vsel %vm744, %v545, %v544
        %v753 = vsel %vm745, %v545, %v544
        %v754 = vand.u32 %v740, 2
        %v755 = vand.u32 %v741, 2
        %vm756 = vcmp.ne.s32.totalorder %v754, 0
        %vm757 = vcmp.ne.s32.totalorder %v755, 0
        %v758 = vsel %vm756, %v748, %v746
        %v759 = vsel %vm757, %v749, %v747
        %v760 = vsel %vm756, %v752, %v750
        %v761 = vsel %vm757, %v753, %v751
        %v762 = vand.u32 %v740, 4
        %v763 = vand.u32 %v741, 4
        %vm764 = vcmp.ne.s32.totalorder %v762, 0
        %vm765 = vcmp.ne.s32.totalorder %v763, 0
        %v766 = vsel %vm764, %v760, %v758
        %v767 = vsel %vm765, %v761, %v759
        %v768 = vperm.slane %v546, 5
        %v769 = vmul.f32 %v768, %v766
        %v770 = vmul.f32 %v768, %v767
        %v771 = vadd.f32 %v733, %v769
        %v772 = vadd.f32 %v734, %v770
        %s773 = sadd.s32 0, 12
        %s774 = smul.addr %s773, 2
        %s775 = scalar_lea.vmem %s451, %s774 [#allocation3]
        %v776 = vld [vmem:[%s775] sm:$0x3]
        %v777 = vld [vmem:[%s775 + $0x2] sm:$0x3]
        %v778 = vunpack.c.0.s8 %v776
        %v779 = vunpack.c.0.s8 %v777
        %v780 = vand.u32 %v778, 1
        %v781 = vand.u32 %v779, 1
        %vm782 = vcmp.ne.s32.totalorder %v780, 0
        %vm783 = vcmp.ne.s32.totalorder %v781, 0
        %v784 = vsel %vm782, %v539, %v538
        %v785 = vsel %vm783, %v539, %v538
        %v786 = vsel %vm782, %v541, %v540
        %v787 = vsel %vm783, %v541, %v540
        %v788 = vsel %vm782, %v543, %v542
        %v789 = vsel %vm783, %v543, %v542
        %v790 = vsel %vm782, %v545, %v544
        %v791 = vsel %vm783, %v545, %v544
        %v792 = vand.u32 %v778, 2
        %v793 = vand.u32 %v779, 2
        %vm794 = vcmp.ne.s32.totalorder %v792, 0
        %vm795 = vcmp.ne.s32.totalorder %v793, 0
        %v796 = vsel %vm794, %v786, %v784
        %v797 = vsel %vm795, %v787, %v785
        %v798 = vsel %vm794, %v790, %v788
        %v799 = vsel %vm795, %v791, %v789
        %v800 = vand.u32 %v778, 4
        %v801 = vand.u32 %v779, 4
        %vm802 = vcmp.ne.s32.totalorder %v800, 0
        %vm803 = vcmp.ne.s32.totalorder %v801, 0
        %v804 = vsel %vm802, %v798, %v796
        %v805 = vsel %vm803, %v799, %v797
        %v806 = vperm.slane %v546, 6
        %v807 = vmul.f32 %v806, %v804
        %v808 = vmul.f32 %v806, %v805
        %v809 = vadd.f32 %v771, %v807
        %v810 = vadd.f32 %v772, %v808
        %s811 = sadd.s32 0, 14
        %s812 = smul.addr %s811, 2
        %s813 = scalar_lea.vmem %s451, %s812 [#allocation3]
        %v814 = vld [vmem:[%s813] sm:$0x3]
        %v815 = vld [vmem:[%s813 + $0x2] sm:$0x3]
        %v816 = vunpack.c.0.s8 %v814
        %v817 = vunpack.c.0.s8 %v815
        %v818 = vand.u32 %v816, 1
        %v819 = vand.u32 %v817, 1
        %vm820 = vcmp.ne.s32.totalorder %v818, 0
        %vm821 = vcmp.ne.s32.totalorder %v819, 0
        %v822 = vsel %vm820, %v539, %v538
        %v823 = vsel %vm821, %v539, %v538
        %v824 = vsel %vm820, %v541, %v540
        %v825 = vsel %vm821, %v541, %v540
        %v826 = vsel %vm820, %v543, %v542
        %v827 = vsel %vm821, %v543, %v542
        %v828 = vsel %vm820, %v545, %v544
        %v829 = vsel %vm821, %v545, %v544
        %v830 = vand.u32 %v816, 2
        %v831 = vand.u32 %v817, 2
        %vm832 = vcmp.ne.s32.totalorder %v830, 0
        %vm833 = vcmp.ne.s32.totalorder %v831, 0
        %v834 = vsel %vm832, %v824, %v822
        %v835 = vsel %vm833, %v825, %v823
        %v836 = vsel %vm832, %v828, %v826
        %v837 = vsel %vm833, %v829, %v827
        %v838 = vand.u32 %v816, 4
        %v839 = vand.u32 %v817, 4
        %vm840 = vcmp.ne.s32.totalorder %v838, 0
        %vm841 = vcmp.ne.s32.totalorder %v839, 0
        %v842 = vsel %vm840, %v836, %v834
        %v843 = vsel %vm841, %v837, %v835
        %v844 = vperm.slane %v546, 7
        %v845 = vmul.f32 %v844, %v842
        %v846 = vmul.f32 %v844, %v843
        %v847 = vadd.f32 %v809, %v845
        %v848 = vadd.f32 %v810, %v846
        %s849 = sadd.s32 0, 16
        %s850 = smul.addr %s849, 2
        %s851 = scalar_lea.vmem %s451, %s850 [#allocation3]
        %v852 = vld [vmem:[%s851] sm:$0x3]
        %v853 = vld [vmem:[%s851 + $0x2] sm:$0x3]
        %v854 = vunpack.c.0.s8 %v852
        %v855 = vunpack.c.0.s8 %v853
        %v856 = vand.u32 %v854, 1
        %v857 = vand.u32 %v855, 1
        %vm858 = vcmp.ne.s32.totalorder %v856, 0
        %vm859 = vcmp.ne.s32.totalorder %v857, 0
        %v860 = vsel %vm858, %v539, %v538
        %v861 = vsel %vm859, %v539, %v538
        %v862 = vsel %vm858, %v541, %v540
        %v863 = vsel %vm859, %v541, %v540
        %v864 = vsel %vm858, %v543, %v542
        %v865 = vsel %vm859, %v543, %v542
        %v866 = vsel %vm858, %v545, %v544
        %v867 = vsel %vm859, %v545, %v544
        %v868 = vand.u32 %v854, 2
        %v869 = vand.u32 %v855, 2
        %vm870 = vcmp.ne.s32.totalorder %v868, 0
        %vm871 = vcmp.ne.s32.totalorder %v869, 0
        %v872 = vsel %vm870, %v862, %v860
        %v873 = vsel %vm871, %v863, %v861
        %v874 = vsel %vm870, %v866, %v864
        %v875 = vsel %vm871, %v867, %v865
        %v876 = vand.u32 %v854, 4
        %v877 = vand.u32 %v855, 4
        %vm878 = vcmp.ne.s32.totalorder %v876, 0
        %vm879 = vcmp.ne.s32.totalorder %v877, 0
        %v880 = vsel %vm878, %v874, %v872
        %v881 = vsel %vm879, %v875, %v873
        %v882 = vperm.slane %v547, 0
        %v883 = vmul.f32 %v882, %v880
        %v884 = vmul.f32 %v882, %v881
        %v885 = vadd.f32 %v847, %v883
        %v886 = vadd.f32 %v848, %v884
        %s887 = sadd.s32 0, 18
        %s888 = smul.addr %s887, 2
        %s889 = scalar_lea.vmem %s451, %s888 [#allocation3]
        %v890 = vld [vmem:[%s889] sm:$0x3]
        %v891 = vld [vmem:[%s889 + $0x2] sm:$0x3]
        %v892 = vunpack.c.0.s8 %v890
        %v893 = vunpack.c.0.s8 %v891
        %v894 = vand.u32 %v892, 1
        %v895 = vand.u32 %v893, 1
        %vm896 = vcmp.ne.s32.totalorder %v894, 0
        %vm897 = vcmp.ne.s32.totalorder %v895, 0
        %v898 = vsel %vm896, %v539, %v538
        %v899 = vsel %vm897, %v539, %v538
        %v900 = vsel %vm896, %v541, %v540
        %v901 = vsel %vm897, %v541, %v540
        %v902 = vsel %vm896, %v543, %v542
        %v903 = vsel %vm897, %v543, %v542
        %v904 = vsel %vm896, %v545, %v544
        %v905 = vsel %vm897, %v545, %v544
        %v906 = vand.u32 %v892, 2
        %v907 = vand.u32 %v893, 2
        %vm908 = vcmp.ne.s32.totalorder %v906, 0
        %vm909 = vcmp.ne.s32.totalorder %v907, 0
        %v910 = vsel %vm908, %v900, %v898
        %v911 = vsel %vm909, %v901, %v899
        %v912 = vsel %vm908, %v904, %v902
        %v913 = vsel %vm909, %v905, %v903
        %v914 = vand.u32 %v892, 4
        %v915 = vand.u32 %v893, 4
        %vm916 = vcmp.ne.s32.totalorder %v914, 0
        %vm917 = vcmp.ne.s32.totalorder %v915, 0
        %v918 = vsel %vm916, %v912, %v910
        %v919 = vsel %vm917, %v913, %v911
        %v920 = vperm.slane %v547, 1
        %v921 = vmul.f32 %v920, %v918
        %v922 = vmul.f32 %v920, %v919
        %v923 = vadd.f32 %v885, %v921
        %v924 = vadd.f32 %v886, %v922
        %s925 = sadd.s32 0, 20
        %s926 = smul.addr %s925, 2
        %s927 = scalar_lea.vmem %s451, %s926 [#allocation3]
        %v928 = vld [vmem:[%s927] sm:$0x3]
        %v929 = vld [vmem:[%s927 + $0x2] sm:$0x3]
        %v930 = vunpack.c.0.s8 %v928
        %v931 = vunpack.c.0.s8 %v929
        %v932 = vand.u32 %v930, 1
        %v933 = vand.u32 %v931, 1
        %vm934 = vcmp.ne.s32.totalorder %v932, 0
        %vm935 = vcmp.ne.s32.totalorder %v933, 0
        %v936 = vsel %vm934, %v539, %v538
        %v937 = vsel %vm935, %v539, %v538
        %v938 = vsel %vm934, %v541, %v540
        %v939 = vsel %vm935, %v541, %v540
        %v940 = vsel %vm934, %v543, %v542
        %v941 = vsel %vm935, %v543, %v542
        %v942 = vsel %vm934, %v545, %v544
        %v943 = vsel %vm935, %v545, %v544
        %v944 = vand.u32 %v930, 2
        %v945 = vand.u32 %v931, 2
        %vm946 = vcmp.ne.s32.totalorder %v944, 0
        %vm947 = vcmp.ne.s32.totalorder %v945, 0
        %v948 = vsel %vm946, %v938, %v936
        %v949 = vsel %vm947, %v939, %v937
        %v950 = vsel %vm946, %v942, %v940
        %v951 = vsel %vm947, %v943, %v941
        %v952 = vand.u32 %v930, 4
        %v953 = vand.u32 %v931, 4
        %vm954 = vcmp.ne.s32.totalorder %v952, 0
        %vm955 = vcmp.ne.s32.totalorder %v953, 0
        %v956 = vsel %vm954, %v950, %v948
        %v957 = vsel %vm955, %v951, %v949
        %v958 = vperm.slane %v547, 2
        %v959 = vmul.f32 %v958, %v956
        %v960 = vmul.f32 %v958, %v957
        %v961 = vadd.f32 %v923, %v959
        %v962 = vadd.f32 %v924, %v960
        %s963 = sadd.s32 0, 22
        %s964 = smul.addr %s963, 2
        %s965 = scalar_lea.vmem %s451, %s964 [#allocation3]
        %v966 = vld [vmem:[%s965] sm:$0x3]
        %v967 = vld [vmem:[%s965 + $0x2] sm:$0x3]
        %v968 = vunpack.c.0.s8 %v966
        %v969 = vunpack.c.0.s8 %v967
        %v970 = vand.u32 %v968, 1
        %v971 = vand.u32 %v969, 1
        %vm972 = vcmp.ne.s32.totalorder %v970, 0
        %vm973 = vcmp.ne.s32.totalorder %v971, 0
        %v974 = vsel %vm972, %v539, %v538
        %v975 = vsel %vm973, %v539, %v538
        %v976 = vsel %vm972, %v541, %v540
        %v977 = vsel %vm973, %v541, %v540
        %v978 = vsel %vm972, %v543, %v542
        %v979 = vsel %vm973, %v543, %v542
        %v980 = vsel %vm972, %v545, %v544
        %v981 = vsel %vm973, %v545, %v544
        %v982 = vand.u32 %v968, 2
        %v983 = vand.u32 %v969, 2
        %vm984 = vcmp.ne.s32.totalorder %v982, 0
        %vm985 = vcmp.ne.s32.totalorder %v983, 0
        %v986 = vsel %vm984, %v976, %v974
        %v987 = vsel %vm985, %v977, %v975
        %v988 = vsel %vm984, %v980, %v978
        %v989 = vsel %vm985, %v981, %v979
        %v990 = vand.u32 %v968, 4
        %v991 = vand.u32 %v969, 4
        %vm992 = vcmp.ne.s32.totalorder %v990, 0
        %vm993 = vcmp.ne.s32.totalorder %v991, 0
        %v994 = vsel %vm992, %v988, %v986
        %v995 = vsel %vm993, %v989, %v987
        %v996 = vperm.slane %v547, 3
        %v997 = vmul.f32 %v996, %v994
        %v998 = vmul.f32 %v996, %v995
        %v999 = vadd.f32 %v961, %v997
        %v1000 = vadd.f32 %v962, %v998
        %s1001 = sadd.s32 0, 24
        %s1002 = smul.addr %s1001, 2
        %s1003 = scalar_lea.vmem %s451, %s1002 [#allocation3]
        %v1004 = vld [vmem:[%s1003] sm:$0x3]
        %v1005 = vld [vmem:[%s1003 + $0x2] sm:$0x3]
        %v1006 = vunpack.c.0.s8 %v1004
        %v1007 = vunpack.c.0.s8 %v1005
        %v1008 = vand.u32 %v1006, 1
        %v1009 = vand.u32 %v1007, 1
        %vm1010 = vcmp.ne.s32.totalorder %v1008, 0
        %vm1011 = vcmp.ne.s32.totalorder %v1009, 0
        %v1012 = vsel %vm1010, %v539, %v538
        %v1013 = vsel %vm1011, %v539, %v538
        %v1014 = vsel %vm1010, %v541, %v540
        %v1015 = vsel %vm1011, %v541, %v540
        %v1016 = vsel %vm1010, %v543, %v542
        %v1017 = vsel %vm1011, %v543, %v542
        %v1018 = vsel %vm1010, %v545, %v544
        %v1019 = vsel %vm1011, %v545, %v544
        %v1020 = vand.u32 %v1006, 2
        %v1021 = vand.u32 %v1007, 2
        %vm1022 = vcmp.ne.s32.totalorder %v1020, 0
        %vm1023 = vcmp.ne.s32.totalorder %v1021, 0
        %v1024 = vsel %vm1022, %v1014, %v1012
        %v1025 = vsel %vm1023, %v1015, %v1013
        %v1026 = vsel %vm1022, %v1018, %v1016
        %v1027 = vsel %vm1023, %v1019, %v1017
        %v1028 = vand.u32 %v1006, 4
        %v1029 = vand.u32 %v1007, 4
        %vm1030 = vcmp.ne.s32.totalorder %v1028, 0
        %vm1031 = vcmp.ne.s32.totalorder %v1029, 0
        %v1032 = vsel %vm1030, %v1026, %v1024
        %v1033 = vsel %vm1031, %v1027, %v1025
        %v1034 = vperm.slane %v547, 4
        %v1035 = vmul.f32 %v1034, %v1032
        %v1036 = vmul.f32 %v1034, %v1033
        %v1037 = vadd.f32 %v999, %v1035
        %v1038 = vadd.f32 %v1000, %v1036
        %s1039 = sadd.s32 0, 26
        %s1040 = smul.addr %s1039, 2
        %s1041 = scalar_lea.vmem %s451, %s1040 [#allocation3]
        %v1042 = vld [vmem:[%s1041] sm:$0x3]
        %v1043 = vld [vmem:[%s1041 + $0x2] sm:$0x3]
        %v1044 = vunpack.c.0.s8 %v1042
        %v1045 = vunpack.c.0.s8 %v1043
        %v1046 = vand.u32 %v1044, 1
        %v1047 = vand.u32 %v1045, 1
        %vm1048 = vcmp.ne.s32.totalorder %v1046, 0
        %vm1049 = vcmp.ne.s32.totalorder %v1047, 0
        %v1050 = vsel %vm1048, %v539, %v538
        %v1051 = vsel %vm1049, %v539, %v538
        %v1052 = vsel %vm1048, %v541, %v540
        %v1053 = vsel %vm1049, %v541, %v540
        %v1054 = vsel %vm1048, %v543, %v542
        %v1055 = vsel %vm1049, %v543, %v542
        %v1056 = vsel %vm1048, %v545, %v544
        %v1057 = vsel %vm1049, %v545, %v544
        %v1058 = vand.u32 %v1044, 2
        %v1059 = vand.u32 %v1045, 2
        %vm1060 = vcmp.ne.s32.totalorder %v1058, 0
        %vm1061 = vcmp.ne.s32.totalorder %v1059, 0
        %v1062 = vsel %vm1060, %v1052, %v1050
        %v1063 = vsel %vm1061, %v1053, %v1051
        %v1064 = vsel %vm1060, %v1056, %v1054
        %v1065 = vsel %vm1061, %v1057, %v1055
        %v1066 = vand.u32 %v1044, 4
        %v1067 = vand.u32 %v1045, 4
        %vm1068 = vcmp.ne.s32.totalorder %v1066, 0
        %vm1069 = vcmp.ne.s32.totalorder %v1067, 0
        %v1070 = vsel %vm1068, %v1064, %v1062
        %v1071 = vsel %vm1069, %v1065, %v1063
        %v1072 = vperm.slane %v547, 5
        %v1073 = vmul.f32 %v1072, %v1070
        %v1074 = vmul.f32 %v1072, %v1071
        %v1075 = vadd.f32 %v1037, %v1073
        %v1076 = vadd.f32 %v1038, %v1074
        %s1077 = sadd.s32 0, 28
        %s1078 = smul.addr %s1077, 2
        %s1079 = scalar_lea.vmem %s451, %s1078 [#allocation3]
        %v1080 = vld [vmem:[%s1079] sm:$0x3]
        %v1081 = vld [vmem:[%s1079 + $0x2] sm:$0x3]
        %v1082 = vunpack.c.0.s8 %v1080
        %v1083 = vunpack.c.0.s8 %v1081
        %v1084 = vand.u32 %v1082, 1
        %v1085 = vand.u32 %v1083, 1
        %vm1086 = vcmp.ne.s32.totalorder %v1084, 0
        %vm1087 = vcmp.ne.s32.totalorder %v1085, 0
        %v1088 = vsel %vm1086, %v539, %v538
        %v1089 = vsel %vm1087, %v539, %v538
        %v1090 = vsel %vm1086, %v541, %v540
        %v1091 = vsel %vm1087, %v541, %v540
        %v1092 = vsel %vm1086, %v543, %v542
        %v1093 = vsel %vm1087, %v543, %v542
        %v1094 = vsel %vm1086, %v545, %v544
        %v1095 = vsel %vm1087, %v545, %v544
        %v1096 = vand.u32 %v1082, 2
        %v1097 = vand.u32 %v1083, 2
        %vm1098 = vcmp.ne.s32.totalorder %v1096, 0
        %vm1099 = vcmp.ne.s32.totalorder %v1097, 0
        %v1100 = vsel %vm1098, %v1090, %v1088
        %v1101 = vsel %vm1099, %v1091, %v1089
        %v1102 = vsel %vm1098, %v1094, %v1092
        %v1103 = vsel %vm1099, %v1095, %v1093
        %v1104 = vand.u32 %v1082, 4
        %v1105 = vand.u32 %v1083, 4
        %vm1106 = vcmp.ne.s32.totalorder %v1104, 0
        %vm1107 = vcmp.ne.s32.totalorder %v1105, 0
        %v1108 = vsel %vm1106, %v1102, %v1100
        %v1109 = vsel %vm1107, %v1103, %v1101
        %v1110 = vperm.slane %v547, 6
        %v1111 = vmul.f32 %v1110, %v1108
        %v1112 = vmul.f32 %v1110, %v1109
        %v1113 = vadd.f32 %v1075, %v1111
        %v1114 = vadd.f32 %v1076, %v1112
        %s1115 = sadd.s32 0, 30
        %s1116 = smul.addr %s1115, 2
        %s1117 = scalar_lea.vmem %s451, %s1116 [#allocation3]
        %v1118 = vld [vmem:[%s1117] sm:$0x3]
        %v1119 = vld [vmem:[%s1117 + $0x2] sm:$0x3]
        %v1120 = vunpack.c.0.s8 %v1118
        %v1121 = vunpack.c.0.s8 %v1119
        %v1122 = vand.u32 %v1120, 1
        %v1123 = vand.u32 %v1121, 1
        %vm1124 = vcmp.ne.s32.totalorder %v1122, 0
        %vm1125 = vcmp.ne.s32.totalorder %v1123, 0
        %v1126 = vsel %vm1124, %v539, %v538
        %v1127 = vsel %vm1125, %v539, %v538
        %v1128 = vsel %vm1124, %v541, %v540
        %v1129 = vsel %vm1125, %v541, %v540
        %v1130 = vsel %vm1124, %v543, %v542
        %v1131 = vsel %vm1125, %v543, %v542
        %v1132 = vsel %vm1124, %v545, %v544
        %v1133 = vsel %vm1125, %v545, %v544
        %v1134 = vand.u32 %v1120, 2
        %v1135 = vand.u32 %v1121, 2
        %vm1136 = vcmp.ne.s32.totalorder %v1134, 0
        %vm1137 = vcmp.ne.s32.totalorder %v1135, 0
        %v1138 = vsel %vm1136, %v1128, %v1126
        %v1139 = vsel %vm1137, %v1129, %v1127
        %v1140 = vsel %vm1136, %v1132, %v1130
        %v1141 = vsel %vm1137, %v1133, %v1131
        %v1142 = vand.u32 %v1120, 4
        %v1143 = vand.u32 %v1121, 4
        %vm1144 = vcmp.ne.s32.totalorder %v1142, 0
        %vm1145 = vcmp.ne.s32.totalorder %v1143, 0
        %v1146 = vsel %vm1144, %v1140, %v1138
        %v1147 = vsel %vm1145, %v1141, %v1139
        %v1148 = vperm.slane %v547, 7
        %v1149 = vmul.f32 %v1148, %v1146
        %v1150 = vmul.f32 %v1148, %v1147
        %v1151 = vadd.f32 %v1113, %v1149
        %v1152 = vadd.f32 %v1114, %v1150
        %1153 = vst [vmem:[%s488] sm:$0xff] %v1151
        %1154 = vst [vmem:[%s488 + $0x8] sm:$0xff] %v1152
        %s1155 = sand.u32 %s125, 1
        %s1156 = scalar_lea.sflag [#allocation6], %s1155
        %s1157 = sand.u32 %s125, 1
        %s1158 = smul.addr %s1157, 16
        %s1159 = scalar_lea.vmem [#allocation5], %s1158
        // Predicated region
        $region154: #{relate_module_batched.1} parent=140 // pred_check
          %p1160 = pneg %p135
        $region155: #{relate_module_batched.1} parent=140 // pred_check_branch
          %1162 = sbr.rel (%p1160) target = $region157
        $region156: #{relate_module_batched.1} parent=140 // pred_region
          %1164 = vsyncadd %s1156, 0
          %s1165 = smul.addr %s18, 8
          %s1166 = scalar_lea.hbm %s4, %s1165
          %s1167 = sshll.u32 %s1159, 4
          %s1168 = int_to_ptr.vmem [resolvable:$true] %s1167
          %s1169 = sshll.u32 %s1166, 4
          %s1170 = int_to_ptr.hbm [resolvable:$true] %s1169
          %1175 = dma.vmem_to_hbm [thread:$0]  %s1168, 256, %s1170, %s1156, 128, 256, 8
        $region157: #{relate_module_batched.1} parent=140 // pred_fallthru
          _
      $region141: #{relate_module_batched.1} parent=5 // pred_fallthru
        _
      %p1176 = scmp.le.s32.totalorder 2, %s13
      // Predicated region
      $region158: #{relate_module_batched.1} parent=5 // pred_check
        %p1177 = pneg %p1176
      $region159: #{relate_module_batched.1} parent=5 // pred_check_branch
        %1179 = sbr.rel (%p1177) target = $region161
      $region160: #{relate_module_batched.1} parent=5 // pred_region
        %s1180 = ssub.s32 %s13, 2
        // Predicated region
        $region162: #{relate_module_batched.1} parent=160 // pred_check
          %p1181 = pneg %p141
        $region163: #{relate_module_batched.1} parent=160 // pred_check_branch
          %1183 = sbr.rel (%p1181) target = $region165
        $region164: #{relate_module_batched.1} parent=160 // pred_region
          %s1184 = sand.u32 %s126, 1
          %s1185 = scalar_lea.sflag [#allocation6], %s1184
          %s1186 = sand.u32 %s126, 1
          %s1187 = smul.addr %s1186, 16
          %s1188 = scalar_lea.vmem [#allocation5], %s1187
          %1190 = dma.done %s1185, 256
        $region165: #{relate_module_batched.1} parent=160 // pred_fallthru
          _
      $region161: #{relate_module_batched.1} parent=5 // pred_fallthru
        _
    $region6: #{relate_module_batched.1} parent=1 // loop_footer
      %s17 = sadd.s32 1, %s13
    $region7: #{relate_module_batched.1} parent=1 // loop_footer_branch
      %12 = sbr.rel target = $region3
    $region8: #{relate_module_batched.1} parent=1 // loop_exit
      _
    %1191 = vsyncpa [#allocation6], 1
    %s1192 = scalar_lea.sflag [#allocation6], 1
    %1193 = vsyncpa %s1192, 1

</llo_original>
